<compile_context>
chip_gen: v5e
topology: v5e:2x2
jax: 0.10.0
libtpu: 0.0.40
codegen_flags: <defaults>
</compile_context>

<pallas_src>
import functools

import jax
import jax.numpy as jnp
from jax.experimental import pallas as pl
from jax.experimental.pallas import tpu as pltpu

NUM_BREEDS = 120    # dog-breed-identification has 120 unique breeds
IN_FEATURES = 2048


def _round_up(x, m):
    return (x + m - 1) // m * m


def _vmem_capacity_bytes():
    """Physical VMEM per TensorCore (fallback: 64 MiB, the v7x minimum)."""
    try:
        info = pltpu.get_tpu_info()
        cap = getattr(info, "vmem_capacity_bytes", None)
        if cap:
            return int(cap)
    except Exception:
        pass
    return 64 << 20


def _pool_fc_kernel(x_ref, w_ref, b_ref, o_ref, acc_ref, *, inv_hw):
    # Grid = (batch tiles, C chunks); k (C chunk) is the reduction axis.
    # x_ref: (TB, TC, HW)  w_ref: (TC, O_pad)  b_ref: (1, O_pad)
    # o_ref: (TB, O_pad)   acc_ref: (TB, O_pad) f32 scratch
    k = pl.program_id(1)

    @pl.when(k == 0)
    def _init():
        acc_ref[...] = jnp.zeros_like(acc_ref)

    # Pool numerator: XLU lane reduce over the spatial axis, accumulated in f32.
    pooled = jnp.sum(x_ref[...].astype(jnp.float32), axis=-1)          # (TB, TC) f32
    # Tiny MXU matmul.  Keep pooled sums (and upcast weights) in f32: bf16 weights
    # only buy HBM/VMEM savings, the MXU time is negligible either way.
    acc_ref[...] += jnp.dot(pooled, w_ref[...].astype(jnp.float32),
                            preferred_element_type=jnp.float32)

    @pl.when(k == pl.num_programs(1) - 1)
    def _finalize():
        # Apply 1/(H*W) on the small output tile, then bias; lane-dense store.
        o_ref[...] = acc_ref[...] * inv_hw + b_ref[...]


def res_transfer_net(x_nchw, w, b, *, use_bf16_weights=False, tb=None, tc=None):
    """x_nchw: (B, C, H, W) f32 or bf16;  w: (C, O);  b: (O,).  Returns (B, O) f32."""
    B, C, H, W = x_nchw.shape
    Cw, O = w.shape
    assert Cw == C, (Cw, C)
    HW = H * W

    # Free reshape only -- no HBM transpose; the kernel pools over the last axis.
    x3 = x_nchw.reshape(B, C, HW)
    x_itemsize = jnp.dtype(x3.dtype).itemsize

    # Lane-dense output: pad O up to a multiple of 128 (sliced back after the call).
    O_pad = _round_up(max(O, 128), 128)
    w_p = w if O_pad == O else jnp.pad(w, ((0, 0), (0, O_pad - O)))
    b_p = (b if O_pad == O else jnp.pad(b, (0, O_pad - O)))
    b_p = b_p.reshape(1, O_pad).astype(jnp.float32)
    if use_bf16_weights:
        w_p = w_p.astype(jnp.bfloat16)     # halves weight DMA; accumulation stays f32
    w_itemsize = jnp.dtype(w_p.dtype).itemsize

    # ---------------- tile selection (lane/sublane-padding aware) ----------------
    sub_x = 16 if x_itemsize == 2 else 8            # bf16 packs 16 sublanes per vreg
    HW_pad = _round_up(HW, 128)                     # last dim pads to 128 lanes in VMEM

    # C chunk: ~512 channels per step when C is large (fits v7x VMEM, gives small-batch
    # cases real pipelining); full C when small.
    if tc is not None:
        TC = int(tc)
    else:
        TC = C
        if C > 512:
            for cand in (512, 384, 256, 128, 64, 32, 16):
                if C % cand == 0 and cand % sub_x == 0:
                    TC = cand
                    break
    assert C % TC == 0, (C, TC)
    TC_pad = _round_up(TC, sub_x)

    vmem_cap = _vmem_capacity_bytes()
    # Stay well under physical VMEM (v7x: 64 MiB/TC); exploit v5e/v6e's 128 MiB.
    vmem_budget = max(32 << 20, min(vmem_cap - (8 << 20), int(vmem_cap * 0.85)))

    # Real (padded) VMEM footprints.
    x_row_bytes = TC_pad * HW_pad * x_itemsize               # one batch row of one x buffer
    fixed_bytes = (2 * TC_pad * O_pad * w_itemsize           # w (double-buffered)
                   + 2 * 8 * O_pad * 4                       # bias (sublane-padded)
                   + (4 << 20))                              # Mosaic internal scratch headroom
    per_tb_bytes = 2 * x_row_bytes + 3 * O_pad * 4           # 2 x bufs + 2 out bufs + acc
    tb_max = max(1, (vmem_budget - fixed_bytes) // per_tb_bytes)

    if tb is not None:
        TB = int(tb)
    else:
        tb_cap = int(max(8, min(tb_max, 256)) // 8 * 8)
        if B <= 8:
            TB = B                                            # single tile, block == full batch
        else:
            TB = tb_cap
            # Prefer an even number of batch tiles >= 2 so the "parallel" axis splits
            # across both TensorCores on megacore parts (v7x).
            for n_tiles in (2, 4, 6, 8, 12, 16, 24, 32, 48, 64, 96, 128):
                cand = _round_up(-(-B // n_tiles), 8)
                if cand <= tb_cap:
                    TB = cand
                    break

    if TB >= B:
        B_pad = B if B <= 8 else _round_up(B, 8)
        TB = B_pad                                            # single batch tile
    else:
        TB = max(8, (TB // 8) * 8)                            # sublane rule on the output block
        B_pad = _round_up(B, TB)
    if B_pad != B:
        x3 = jnp.pad(x3, ((0, B_pad - B), (0, 0), (0, 0)))

    grid = (B_pad // TB, C // TC)
    nb, nc = grid

    # Padded-footprint VMEM need -> explicit limit with headroom, capped at the budget.
    vmem_needed = (2 * TB * x_row_bytes
                   + 2 * TC_pad * O_pad * w_itemsize
                   + 2 * 8 * O_pad * 4
                   + 2 * TB * O_pad * 4
                   + TB * O_pad * 4)
    vmem_limit = int(min(max(int(vmem_needed * 1.25) + (4 << 20), 32 << 20), vmem_budget))

    cost = pl.CostEstimate(
        flops=int(B_pad * C * HW + 2 * B_pad * C * O_pad),
        transcendentals=0,
        bytes_accessed=int(B_pad * C * HW * x_itemsize           # x read once
                           + nb * C * O_pad * w_itemsize          # w re-streamed per batch tile
                           + B_pad * O_pad * 4 + O_pad * 4),
    )

    out = pl.pallas_call(
        functools.partial(_pool_fc_kernel, inv_hw=1.0 / HW),
        out_shape=jax.ShapeDtypeStruct((B_pad, O_pad), jnp.float32),
        grid=grid,
        in_specs=[
            pl.BlockSpec((TB, TC, HW), lambda i, k: (i, k, 0)),   # batch- & C-tiled feature map
            pl.BlockSpec((TC, O_pad), lambda i, k: (k, 0)),       # weight C-chunk
            pl.BlockSpec((1, O_pad), lambda i, k: (0, 0)),        # bias (constant block)
        ],
        out_specs=pl.BlockSpec((TB, O_pad), lambda i, k: (i, 0)),
        scratch_shapes=[pltpu.VMEM((TB, O_pad), jnp.float32)],     # f32 accumulator
        compiler_params=pltpu.CompilerParams(
            dimension_semantics=("parallel", "arbitrary"),         # batch parallel, C reduction
            vmem_limit_bytes=vmem_limit,
        ),
        cost_estimate=cost,
    )(x3, w_p, b_p)

    return out[:B, :O]


if __name__ == "__main__":
    key = jax.random.PRNGKey(0)
    kx, kw, kb, kx2, kw2, kb2, kx3, kw3, kb3 = jax.random.split(key, 9)

    # ---- Test 1: spec-sized channels (2048), tiny batch -> grid (1, 4), C-chunked ----
    B, C, H, W = 2, IN_FEATURES, 8, 8
    x = jax.random.normal(kx, (B, C, H, W), dtype=jnp.float32)

    bound = 1.0 / (IN_FEATURES ** 0.5)   # mimics nn.Linear default uniform bound
    w = jax.random.uniform(kw, (IN_FEATURES, NUM_BREEDS),
                           minval=-bound, maxval=bound, dtype=jnp.float32)
    b = jax.random.uniform(kb, (NUM_BREEDS,),
                           minval=-bound, maxval=bound, dtype=jnp.float32)

    out = jax.block_until_ready(res_transfer_net(x, w, b))
    ref = jnp.mean(x, axis=(2, 3)) @ w + b
    assert out.shape == (B, NUM_BREEDS)
    assert jnp.allclose(out, ref, atol=1e-4, rtol=1e-4)

    # bf16 weights (halved weight DMA; pooled sums stay f32 in-kernel).
    out_bf_w = jax.block_until_ready(res_transfer_net(x, w, b, use_bf16_weights=True))
    assert jnp.allclose(out_bf_w, ref, atol=3e-2, rtol=3e-2)

    # bf16 activations: halves the dominant x HBM traffic; f32 accumulation in-kernel.
    x_bf = x.astype(jnp.bfloat16)
    out_bf_x = jax.block_until_ready(res_transfer_net(x_bf, w, b, use_bf16_weights=True))
    assert jnp.allclose(out_bf_x, ref, atol=3e-2, rtol=3e-2)

    # ---- Test 2: batch-tiled grid + batch padding, single C chunk (small shapes) ----
    B2, C2, H2, W2, O2 = 10, 256, 4, 4, 120
    x2 = jax.random.normal(kx2, (B2, C2, H2, W2), dtype=jnp.float32)
    w2 = jax.random.uniform(kw2, (C2, O2), minval=-0.05, maxval=0.05, dtype=jnp.float32)
    b2 = jax.random.uniform(kb2, (O2,), minval=-0.05, maxval=0.05, dtype=jnp.float32)

    out2 = jax.block_until_ready(res_transfer_net(x2, w2, b2, tb=8))   # TB=8, B padded 10->16, grid=(2,1)
    ref2 = jnp.mean(x2, axis=(2, 3)) @ w2 + b2
    assert out2.shape == (B2, O2)
    assert jnp.allclose(out2, ref2, atol=1e-4, rtol=1e-4)

    # ---- Test 3: both axes tiled (batch tiles x C chunks), auto TB (even grid) ----
    B3, C3, H3, W3, O3 = 12, 1024, 4, 4, 120
    x3i = jax.random.normal(kx3, (B3, C3, H3, W3), dtype=jnp.float32)
    w3 = jax.random.uniform(kw3, (C3, O3), minval=-0.03, maxval=0.03, dtype=jnp.float32)
    b3 = jax.random.uniform(kb3, (O3,), minval=-0.03, maxval=0.03, dtype=jnp.float32)

    out3 = jax.block_until_ready(res_transfer_net(x3i, w3, b3))        # TB=8, TC=512 -> grid=(2,2)
    ref3 = jnp.mean(x3i, axis=(2, 3)) @ w3 + b3
    assert out3.shape == (B3, O3)
    assert jnp.allclose(out3, ref3, atol=1e-4, rtol=1e-4)

    print("KERNEL_OK")
</pallas_src>

<mosaic_0001>
module attributes {stable_mosaic.version = 11 : i64} {
  func.func @_pool_fc_kernel(%arg0: i32, %arg1: i32, %arg2: memref<2x512x64xf32, #tpu.memory_space<vmem>>, %arg3: memref<512x128xf32, #tpu.memory_space<vmem>>, %arg4: memref<1x128xf32, #tpu.memory_space<vmem>>, %arg5: memref<2x128xf32, #tpu.memory_space<vmem>>, %arg6: memref<2x128xf32, #tpu.memory_space<vmem>>) attributes {dimension_semantics = [#tpu.dimension_semantics<parallel>, #tpu.dimension_semantics<arbitrary>], iteration_bounds = array<i64: 1, 4>, scalar_prefetch = 0 : i64, scratch_operands = 1 : i64, tpu.core_type = #tpu.core_type<tc>, window_params = [{transform_indices = @transform_0, window_bounds = array<i64: 2, 512, 64>}, {transform_indices = @transform_1, window_bounds = array<i64: 512, 128>}, {pipeline_mode = #tpu.pipeline_mode<synchronous>, transform_indices = @transform_2, window_bounds = array<i64: 1, 128>}, {transform_indices = @transform_3, window_bounds = array<i64: 2, 128>}]} {
    %c0_i32 = arith.constant 0 : i32
    %0 = arith.cmpi eq, %arg1, %c0_i32 : i32
    %1 = arith.extui %0 : i1 to i32
    %c0_i32_0 = arith.constant 0 : i32
    %2 = arith.cmpi ne, %1, %c0_i32_0 : i32
    scf.if %2 {
      %cst_11 = arith.constant 0.000000e+00 : f32
      %13 = vector.broadcast %cst_11 : f32 to vector<2x128xf32>
      %c0_12 = arith.constant 0 : index
      %c0_13 = arith.constant 0 : index
      %14 = vector.load %arg6[%c0_12, %c0_13] : memref<2x128xf32, #tpu.memory_space<vmem>>, vector<2x128xf32>
      tpu.vector_store %arg6[%c0_12, %c0_13], %13 {strides = array<i32>} : memref<2x128xf32, #tpu.memory_space<vmem>>, vector<2x128xf32>,
    } else {
    }
    %c0 = arith.constant 0 : index
    %c0_1 = arith.constant 0 : index
    %c0_2 = arith.constant 0 : index
    %3 = vector.load %arg2[%c0, %c0_1, %c0_2] : memref<2x512x64xf32, #tpu.memory_space<vmem>>, vector<2x512x64xf32>
    %cst = arith.constant dense<0.000000e+00> : vector<2x512xf32>
    %4 = vector.multi_reduction <add>, %3, %cst [2] : vector<2x512x64xf32> to vector<2x512xf32>
    %c0_3 = arith.constant 0 : index
    %c0_4 = arith.constant 0 : index
    %5 = vector.load %arg6[%c0_3, %c0_4] : memref<2x128xf32, #tpu.memory_space<vmem>>, vector<2x128xf32>
    %c0_5 = arith.constant 0 : index
    %c0_6 = arith.constant 0 : index
    %6 = vector.load %arg3[%c0_5, %c0_6] : memref<512x128xf32, #tpu.memory_space<vmem>>, vector<512x128xf32>
    %cst_7 = arith.constant dense<0.000000e+00> : vector<2x128xf32>
    %7 = tpu.matmul %4, %6, %cst_7 {dimension_numbers = #tpu.dot_dimension_numbers<[1], [0], [0], [1], [0, 0, 1, 1], [], []>} : vector<2x512xf32>, vector<512x128xf32>, vector<2x128xf32> -> vector<2x128xf32>
    %8 = arith.addf %5, %7 : vector<2x128xf32>
    %c0_8 = arith.constant 0 : index
    %c0_9 = arith.constant 0 : index
    %9 = vector.load %arg6[%c0_8, %c0_9] : memref<2x128xf32, #tpu.memory_space<vmem>>, vector<2x128xf32>
    tpu.vector_store %arg6[%c0_8, %c0_9], %8 {strides = array<i32>} : memref<2x128xf32, #tpu.memory_space<vmem>>, vector<2x128xf32>,
    %c3_i32 = arith.constant 3 : i32
    %10 = arith.cmpi eq, %arg1, %c3_i32 : i32
    %11 = arith.extui %10 : i1 to i32
    %c0_i32_10 = arith.constant 0 : i32
    %12 = arith.cmpi ne, %11, %c0_i32_10 : i32
    scf.if %12 {
      %c0_11 = arith.constant 0 : index
      %c0_12 = arith.constant 0 : index
      %13 = vector.load %arg6[%c0_11, %c0_12] : memref<2x128xf32, #tpu.memory_space<vmem>>, vector<2x128xf32>
      %cst_13 = arith.constant 1.562500e-02 : f32
      %14 = vector.broadcast %cst_13 : f32 to vector<2x128xf32>
      %15 = arith.mulf %13, %14 : vector<2x128xf32>
      %c0_14 = arith.constant 0 : index
      %c0_15 = arith.constant 0 : index
      %16 = vector.load %arg4[%c0_14, %c0_15] : memref<1x128xf32, #tpu.memory_space<vmem>>, vector<1x128xf32>
      %17 = vector.broadcast %16 : vector<1x128xf32> to vector<2x128xf32>
      %18 = arith.addf %15, %17 : vector<2x128xf32>
      %c0_16 = arith.constant 0 : index
      %c0_17 = arith.constant 0 : index
      %19 = vector.load %arg5[%c0_16, %c0_17] : memref<2x128xf32, #tpu.memory_space<vmem>>, vector<2x128xf32>
      tpu.vector_store %arg5[%c0_16, %c0_17], %18 {strides = array<i32>} : memref<2x128xf32, #tpu.memory_space<vmem>>, vector<2x128xf32>,
    } else {
    }
    return
  }
  func.func @transform_0(%arg0: i32, %arg1: i32) -> (i32, i32, i32) {
    %c0_i32 = arith.constant 0 : i32
    %c0_i32_0 = arith.constant 0 : i32
    return %arg0, %arg1, %c0_i32 : i32, i32, i32
  }
  func.func @transform_1(%arg0: i32, %arg1: i32) -> (i32, i32) {
    %c0_i32 = arith.constant 0 : i32
    %c0_i32_0 = arith.constant 0 : i32
    return %arg1, %c0_i32 : i32, i32
  }
  func.func @transform_2(%arg0: i32, %arg1: i32) -> (i32, i32) {
    %c0_i32 = arith.constant 0 : i32
    %c0_i32_0 = arith.constant 0 : i32
    %c0_i32_1 = arith.constant 0 : i32
    return %c0_i32, %c0_i32_0 : i32, i32
  }
  func.func @transform_3(%arg0: i32, %arg1: i32) -> (i32, i32) {
    %c0_i32 = arith.constant 0 : i32
    %c0_i32_0 = arith.constant 0 : i32
    return %arg0, %c0_i32 : i32, i32
  }
}

</mosaic_0001>

<llo_original>
// kernel: tpu_custom_call.1
$region0: #{tpu_custom_call.1}
  #allocation0 [shape = 'u32[]', space=smem, size = 0x4, offset = 0x4, fixed_abs, tag = 'smem constant byte address 0x4 - core index']
  #allocation1 [shape = 'u32[72,128]{1,0:T(1,128)}', space=vmem, size = 0x9000, scoped, tag = 'internal scratch']
  #allocation2 [shape = 'f32[2,128]{1,0:T(2,128)}', space=vmem, size = 0x400, scoped, tag = 'scratch operand']
  %s0 = inlined_call_operand.vmem [shape: f32[2,2048,64], index: 0, kind: input, shape index: {}]
  %s1 = inlined_call_operand.vmem [shape: f32[2048,128], index: 1, kind: input, shape index: {}]
  %s2 = inlined_call_operand.vmem [shape: f32[1,128], index: 2, kind: input, shape index: {}]
  %s3 = inlined_call_operand.hbm [shape: f32[2,128], index: 3, kind: output, shape index: {}]
  %s4 = sld [smem:[#allocation0]]
  $region91: #{tpu_custom_call.1} parent=0
    _
  %s6 = ssub.s32 1, %s4
  %s7 = scalar_select 0, %s6, %s4
  $region1: #{tpu_custom_call.1} parent=0
    #allocation3 [shape = 'u8[1048576]{0}', space=vmem, size = 0x100000, scoped, tag = 'input window, operand 0']
    #allocation4 [shape = 'u8[1024]{0}', space=vmem, size = 0x400, scoped, tag = 'output window, operand 0, single buffered']
    #allocation5 [shape = 's32[2]{0}', space=sflag, size = 0x8, scoped, tag = 'scoped memory for tpu_custom_call.1']
    %8 = vsyncpa [#allocation5], 0
    loop: start=0, step=1, limit=6
    $region2: #{tpu_custom_call.1} parent=1 // loop_pre_header
      _
    $region3: #{tpu_custom_call.1} parent=1 // loop_header
      %s10 = sphi 0, %s14
      %p11 = scmp.ge.s32.totalorder %s10, 6
      %s17 = sphi 0, %s29
      %s18 = sphi 0, %s25
      %s19 = sphi 0, %s17
      %s20 = sphi 0, %s18
      %s21 = sphi 0, %s19
      %s22 = sphi 0, %s20
      %s34 = sphi 0, %s36
      %s37 = sphi 0, %s34
      %s38 = sphi 0, %s37
      %s54 = sphi 0, %s38
      %s60 = sphi 0, %s62
      %s63 = sphi 0, %s60
      %s64 = sphi 0, %s63
      %s80 = sphi 0, %s64
      %s84 = sphi 0, %s84
      %s86 = sphi 0, %s84
      %s87 = sphi 0, %s86
      %s101 = sphi 0, %s87
      %s107 = sphi 0, %s109
      %s110 = sphi 0, %s107
      %s111 = sphi 0, %s110
      %s127 = sphi 0, %s111
    $region4: #{tpu_custom_call.1} parent=1 // loop_header_branch
      %13 = sbr.rel (%p11) target = $region8
    $region5: #{tpu_custom_call.1} parent=1 // loop_body
      %s15 = ssub.s32 %s10, 1
      %s16 = ssub.s32 %s10, 2
      %s23 = sadd.s32 1, %s18
      %p24 = scmp.ge.s32.totalorder %s23, 4
      %s25 = scalar_select %p24, 0, %s23
      %s26 = sadd.s32 1, %s17
      %s27 = scalar_select %p24, %s26, %s17
      %p28 = scmp.ge.s32.totalorder %s27, 1
      %s29 = scalar_select %p28, 0, %s27
      %s30 = ssub.s32 %s17, %s29
      %s31 = ssub.s32 %s18, %s25
      %s32 = sor.u32 %s30, %s31
      %p33 = scmp.eq.s32.totalorder %s32, 0
      %s35 = sadd.s32 %s34, 1
      %s36 = scalar_select %p33, %s34, %s35
      %p39 = pneg %p33
      %p40 = scmp.eq.s32.totalorder %s10, 3
      %p41 = por %p39, %p40
      %p42 = scmp.ne.s32.totalorder %s34, %s37
      %p43 = scmp.eq.s32.totalorder %s10, 0
      %p44 = por %p42, %p43
      %p45 = scmp.ne.s32.totalorder %s34, %s37
      %p46 = scmp.eq.s32.totalorder %s15, 3
      %p47 = por %p45, %p46
      %p48 = scmp.ne.s32.totalorder %s37, %s38
      %p49 = scmp.eq.s32.totalorder %s15, 0
      %p50 = por %p48, %p49
      %p51 = scmp.ne.s32.totalorder %s37, %s38
      %p52 = scmp.eq.s32.totalorder %s16, 3
      %p53 = por %p51, %p52
      %p55 = scmp.ne.s32.totalorder %s38, %s54
      %p56 = scmp.eq.s32.totalorder %s16, 0
      %p57 = por %p55, %p56
      %s58 = ssub.s32 %s18, %s25
      %p59 = scmp.eq.s32.totalorder %s58, 0
      %s61 = sadd.s32 %s60, 1
      %s62 = scalar_select %p59, %s60, %s61
      %p65 = pneg %p59
      %p66 = scmp.eq.s32.totalorder %s10, 3
      %p67 = por %p65, %p66
      %p68 = scmp.ne.s32.totalorder %s60, %s63
      %p69 = scmp.eq.s32.totalorder %s10, 0
      %p70 = por %p68, %p69
      %p71 = scmp.ne.s32.totalorder %s60, %s63
      %p72 = scmp.eq.s32.totalorder %s15, 3
      %p73 = por %p71, %p72
      %p74 = scmp.ne.s32.totalorder %s63, %s64
      %p75 = scmp.eq.s32.totalorder %s15, 0
      %p76 = por %p74, %p75
      %p77 = scmp.ne.s32.totalorder %s63, %s64
      %p78 = scmp.eq.s32.totalorder %s16, 3
      %p79 = por %p77, %p78
      %p81 = scmp.ne.s32.totalorder %s64, %s80
      %p82 = scmp.eq.s32.totalorder %s16, 0
      %p83 = por %p81, %p82
      %s85 = sadd.s32 %s84, 1
      %p88 = scmp.eq.s32.totalorder %s10, 3
      %p89 = scmp.ne.s32.totalorder %s84, %s86
      %p90 = scmp.eq.s32.totalorder %s10, 0
      %p91 = por %p89, %p90
      %p92 = scmp.ne.s32.totalorder %s84, %s86
      %p93 = scmp.eq.s32.totalorder %s15, 3
      %p94 = por %p92, %p93
      %p95 = scmp.ne.s32.totalorder %s86, %s87
      %p96 = scmp.eq.s32.totalorder %s15, 0
      %p97 = por %p95, %p96
      %p98 = scmp.ne.s32.totalorder %s86, %s87
      %p99 = scmp.eq.s32.totalorder %s16, 3
      %p100 = por %p98, %p99
      %p102 = scmp.ne.s32.totalorder %s87, %s101
      %p103 = scmp.eq.s32.totalorder %s16, 0
      %p104 = por %p102, %p103
      %s105 = ssub.s32 %s17, %s29
      %p106 = scmp.eq.s32.totalorder %s105, 0
      %s108 = sadd.s32 %s107, 1
      %s109 = scalar_select %p106, %s107, %s108
      %p112 = pneg %p106
      %p113 = scmp.eq.s32.totalorder %s10, 3
      %p114 = por %p112, %p113
      %p115 = scmp.ne.s32.totalorder %s107, %s110
      %p116 = scmp.eq.s32.totalorder %s10, 0
      %p117 = por %p115, %p116
      %p118 = scmp.ne.s32.totalorder %s107, %s110
      %p119 = scmp.eq.s32.totalorder %s15, 3
      %p120 = por %p118, %p119
      %p121 = scmp.ne.s32.totalorder %s110, %s111
      %p122 = scmp.eq.s32.totalorder %s15, 0
      %p123 = por %p121, %p122
      %p124 = scmp.ne.s32.totalorder %s110, %s111
      %p125 = scmp.eq.s32.totalorder %s16, 3
      %p126 = por %p124, %p125
      %p128 = scmp.ne.s32.totalorder %s111, %s127
      %p129 = scmp.eq.s32.totalorder %s16, 0
      %p130 = por %p128, %p129
      %p131 = scmp.le.s32.totalorder 1, %s10
      %p132 = scmp.lt.s32.totalorder %s10, 5
      %p133 = pnand %p131, %p132
      %p134 = pneg %p133
      // Predicated region
      $region9: #{tpu_custom_call.1} parent=5 // pred_check
        _
      $region10: #{tpu_custom_call.1} parent=5 // pred_check_branch
        %136 = sbr.rel (%p133) target = $region12
      $region11: #{tpu_custom_call.1} parent=5 // pred_region
        %s137 = ssub.s32 %s10, 1
        // Predicated region
        $region13: #{tpu_custom_call.1} parent=11 // pred_check
          %p138 = pneg %p97
        $region14: #{tpu_custom_call.1} parent=11 // pred_check_branch
          %140 = sbr.rel (%p138) target = $region16
        $region15: #{tpu_custom_call.1} parent=11 // pred_region
          _
        $region16: #{tpu_custom_call.1} parent=11 // pred_fallthru
          _
      $region12: #{tpu_custom_call.1} parent=5 // pred_fallthru
        _
      %p141 = scmp.lt.s32.totalorder %s10, 4
      // Predicated region
      $region17: #{tpu_custom_call.1} parent=5 // pred_check
        %p142 = pneg %p141
      $region18: #{tpu_custom_call.1} parent=5 // pred_check_branch
        %144 = sbr.rel (%p142) target = $region20
      $region19: #{tpu_custom_call.1} parent=5 // pred_region
        // Predicated region
        $region21: #{tpu_custom_call.1} parent=19 // pred_check
          %p145 = pneg %p44
        $region22: #{tpu_custom_call.1} parent=19 // pred_check_branch
          %147 = sbr.rel (%p145) target = $region24
        $region23: #{tpu_custom_call.1} parent=19 // pred_region
          %s148 = sand.u32 %s34, 1
          %s149 = sand.u32 %s34, 1
          %s150 = smul.addr %s149, 1024
          %s151 = scalar_lea.vmem [#allocation3], %s150
          %s152 = smul.u32 2, %s17
          %s153 = smul.u32 64, %s18
          %s154 = smul.addr %s152, 256
          %s155 = sadd.s32 %s153, %s154
          %s156 = smul.addr %s155, 8
          %s157 = scalar_lea.vmem %s0, %s156
          // Predicated region
          $region25: #{tpu_custom_call.1} parent=23 // pred_check
            _
          $region26: #{tpu_custom_call.1} parent=23 // pred_check_branch
            %159 = sbr.rel (0) target = $region28
          $region27: #{tpu_custom_call.1} parent=23 // pred_region
            // Predicated region
            $region29: #{tpu_custom_call.1} parent=27 // pred_check
              _
            $region30: #{tpu_custom_call.1} parent=27 // pred_check_branch
              %161 = sbr.rel (0) target = $region32
            $region31: #{tpu_custom_call.1} parent=27 // pred_region
              // Predicated region
              $region44: #{tpu_custom_call.1} parent=31 // pred_check
                _
              $region45: #{tpu_custom_call.1} parent=31 // pred_check_branch
                %431 = sbr.rel (0) target = $region47
              $region46: #{tpu_custom_call.1} parent=31 // pred_region
                loop: start=0, step=1, limit=1
                $region48: #{tpu_custom_call.1} parent=46 // loop_pre_header
                  _
                $region49: #{tpu_custom_call.1} parent=46 // loop_header
                  %s433 = sphi 0, %s437
                  %p434 = scmp.ge.s32.totalorder %s433, 1
                  %s438 = sphi %s157, %s157
                  %s439 = sphi %s151, %s151
                $region50: #{tpu_custom_call.1} parent=46 // loop_header_branch
                  %436 = sbr.rel (%p434) target = $region54
                $region51: #{tpu_custom_call.1} parent=46 // loop_body
                  %v440 = vld [vmem:[%s438] sm:$0xff]
                  %441 = vst [vmem:[%s439] sm:$0xff] %v440
                  %v442 = vld [vmem:[%s438 + $0x8] sm:$0xff]
                  %443 = vst [vmem:[%s439 + $0x8] sm:$0xff] %v442
                  %v444 = vld [vmem:[%s438 + $0x10] sm:$0xff]
                  %445 = vst [vmem:[%s439 + $0x10] sm:$0xff] %v444
                  %v446 = vld [vmem:[%s438 + $0x18] sm:$0xff]
                  %447 = vst [vmem:[%s439 + $0x18] sm:$0xff] %v446
                  %v448 = vld [vmem:[%s438 + $0x20] sm:$0xff]
                  %449 = vst [vmem:[%s439 + $0x20] sm:$0xff] %v448
                  %v450 = vld [vmem:[%s438 + $0x28] sm:$0xff]
                  %451 = vst [vmem:[%s439 + $0x28] sm:$0xff] %v450
                  %v452 = vld [vmem:[%s438 + $0x30] sm:$0xff]
                  %453 = vst [vmem:[%s439 + $0x30] sm:$0xff] %v452
                  %v454 = vld [vmem:[%s438 + $0x38] sm:$0xff]
                  %455 = vst [vmem:[%s439 + $0x38] sm:$0xff] %v454
                  %v456 = vld [vmem:[%s438 + $0x40] sm:$0xff]
                  %457 = vst [vmem:[%s439 + $0x40] sm:$0xff] %v456
                  %v458 = vld [vmem:[%s438 + $0x48] sm:$0xff]
                  %459 = vst [vmem:[%s439 + $0x48] sm:$0xff] %v458
                  %v460 = vld [vmem:[%s438 + $0x50] sm:$0xff]
                  %461 = vst [vmem:[%s439 + $0x50] sm:$0xff] %v460
                  %v462 = vld [vmem:[%s438 + $0x58] sm:$0xff]
                  %463 = vst [vmem:[%s439 + $0x58] sm:$0xff] %v462
                  %v464 = vld [vmem:[%s438 + $0x60] sm:$0xff]
                  %465 = vst [vmem:[%s439 + $0x60] sm:$0xff] %v464
                  %v466 = vld [vmem:[%s438 + $0x68] sm:$0xff]
                  %467 = vst [vmem:[%s439 + $0x68] sm:$0xff] %v466
                  %v468 = vld [vmem:[%s438 + $0x70] sm:$0xff]
                  %469 = vst [vmem:[%s439 + $0x70] sm:$0xff] %v468
                  %v470 = vld [vmem:[%s438 + $0x78] sm:$0xff]
                  %471 = vst [vmem:[%s439 + $0x78] sm:$0xff] %v470
                  %v472 = vld [vmem:[%s438 + $0x80] sm:$0xff]
                  %473 = vst [vmem:[%s439 + $0x80] sm:$0xff] %v472
                  %v474 = vld [vmem:[%s438 + $0x88] sm:$0xff]
                  %475 = vst [vmem:[%s439 + $0x88] sm:$0xff] %v474
                  %v476 = vld [vmem:[%s438 + $0x90] sm:$0xff]
                  %477 = vst [vmem:[%s439 + $0x90] sm:$0xff] %v476
                  %v478 = vld [vmem:[%s438 + $0x98] sm:$0xff]
                  %479 = vst [vmem:[%s439 + $0x98] sm:$0xff] %v478
                  %v480 = vld [vmem:[%s438 + $0xa0] sm:$0xff]
                  %481 = vst [vmem:[%s439 + $0xa0] sm:$0xff] %v480
                  %v482 = vld [vmem:[%s438 + $0xa8] sm:$0xff]
                  %483 = vst [vmem:[%s439 + $0xa8] sm:$0xff] %v482
                  %v484 = vld [vmem:[%s438 + $0xb0] sm:$0xff]
                  %485 = vst [vmem:[%s439 + $0xb0] sm:$0xff] %v484
                  %v486 = vld [vmem:[%s438 + $0xb8] sm:$0xff]
                  %487 = vst [vmem:[%s439 + $0xb8] sm:$0xff] %v486
                  %v488 = vld [vmem:[%s438 + $0xc0] sm:$0xff]
                  %489 = vst [vmem:[%s439 + $0xc0] sm:$0xff] %v488
                  %v490 = vld [vmem:[%s438 + $0xc8] sm:$0xff]
                  %491 = vst [vmem:[%s439 + $0xc8] sm:$0xff] %v490
                  %v492 = vld [vmem:[%s438 + $0xd0] sm:$0xff]
                  %493 = vst [vmem:[%s439 + $0xd0] sm:$0xff] %v492
                  %v494 = vld [vmem:[%s438 + $0xd8] sm:$0xff]
                  %495 = vst [vmem:[%s439 + $0xd8] sm:$0xff] %v494
                  %v496 = vld [vmem:[%s438 + $0xe0] sm:$0xff]
                  %497 = vst [vmem:[%s439 + $0xe0] sm:$0xff] %v496
                  %v498 = vld [vmem:[%s438 + $0xe8] sm:$0xff]
                  %499 = vst [vmem:[%s439 + $0xe8] sm:$0xff] %v498
                  %v500 = vld [vmem:[%s438 + $0xf0] sm:$0xff]
                  %501 = vst [vmem:[%s439 + $0xf0] sm:$0xff] %v500
                  %v502 = vld [vmem:[%s438 + $0xf8] sm:$0xff]
                  %503 = vst [vmem:[%s439 + $0xf8] sm:$0xff] %v502
                  %v504 = vld [vmem:[%s438 + $0x100] sm:$0xff]
                  %505 = vst [vmem:[%s439 + $0x100] sm:$0xff] %v504
                  %v506 = vld [vmem:[%s438 + $0x108] sm:$0xff]
                  %507 = vst [vmem:[%s439 + $0x108] sm:$0xff] %v506
                  %v508 = vld [vmem:[%s438 + $0x110] sm:$0xff]
                  %509 = vst [vmem:[%s439 + $0x110] sm:$0xff] %v508
                  %v510 = vld [vmem:[%s438 + $0x118] sm:$0xff]
                  %511 = vst [vmem:[%s439 + $0x118] sm:$0xff] %v510
                  %v512 = vld [vmem:[%s438 + $0x120] sm:$0xff]
                  %513 = vst [vmem:[%s439 + $0x120] sm:$0xff] %v512
                  %v514 = vld [vmem:[%s438 + $0x128] sm:$0xff]
                  %515 = vst [vmem:[%s439 + $0x128] sm:$0xff] %v514
                  %v516 = vld [vmem:[%s438 + $0x130] sm:$0xff]
                  %517 = vst [vmem:[%s439 + $0x130] sm:$0xff] %v516
                  %v518 = vld [vmem:[%s438 + $0x138] sm:$0xff]
                  %519 = vst [vmem:[%s439 + $0x138] sm:$0xff] %v518
                  %v520 = vld [vmem:[%s438 + $0x140] sm:$0xff]
                  %521 = vst [vmem:[%s439 + $0x140] sm:$0xff] %v520
                  %v522 = vld [vmem:[%s438 + $0x148] sm:$0xff]
                  %523 = vst [vmem:[%s439 + $0x148] sm:$0xff] %v522
                  %v524 = vld [vmem:[%s438 + $0x150] sm:$0xff]
                  %525 = vst [vmem:[%s439 + $0x150] sm:$0xff] %v524
                  %v526 = vld [vmem:[%s438 + $0x158] sm:$0xff]
                  %527 = vst [vmem:[%s439 + $0x158] sm:$0xff] %v526
                  %v528 = vld [vmem:[%s438 + $0x160] sm:$0xff]
                  %529 = vst [vmem:[%s439 + $0x160] sm:$0xff] %v528
                  %v530 = vld [vmem:[%s438 + $0x168] sm:$0xff]
                  %531 = vst [vmem:[%s439 + $0x168] sm:$0xff] %v530
                  %v532 = vld [vmem:[%s438 + $0x170] sm:$0xff]
                  %533 = vst [vmem:[%s439 + $0x170] sm:$0xff] %v532
                  %v534 = vld [vmem:[%s438 + $0x178] sm:$0xff]
                  %535 = vst [vmem:[%s439 + $0x178] sm:$0xff] %v534
                  %v536 = vld [vmem:[%s438 + $0x180] sm:$0xff]
                  %537 = vst [vmem:[%s439 + $0x180] sm:$0xff] %v536
                  %v538 = vld [vmem:[%s438 + $0x188] sm:$0xff]
                  %539 = vst [vmem:[%s439 + $0x188] sm:$0xff] %v538
                  %v540 = vld [vmem:[%s438 + $0x190] sm:$0xff]
                  %541 = vst [vmem:[%s439 + $0x190] sm:$0xff] %v540
                  %v542 = vld [vmem:[%s438 + $0x198] sm:$0xff]
                  %543 = vst [vmem:[%s439 + $0x198] sm:$0xff] %v542
                  %v544 = vld [vmem:[%s438 + $0x1a0] sm:$0xff]
                  %545 = vst [vmem:[%s439 + $0x1a0] sm:$0xff] %v544
                  %v546 = vld [vmem:[%s438 + $0x1a8] sm:$0xff]
                  %547 = vst [vmem:[%s439 + $0x1a8] sm:$0xff] %v546
                  %v548 = vld [vmem:[%s438 + $0x1b0] sm:$0xff]
                  %549 = vst [vmem:[%s439 + $0x1b0] sm:$0xff] %v548
                  %v550 = vld [vmem:[%s438 + $0x1b8] sm:$0xff]
                  %551 = vst [vmem:[%s439 + $0x1b8] sm:$0xff] %v550
                  %v552 = vld [vmem:[%s438 + $0x1c0] sm:$0xff]
                  %553 = vst [vmem:[%s439 + $0x1c0] sm:$0xff] %v552
                  %v554 = vld [vmem:[%s438 + $0x1c8] sm:$0xff]
                  %555 = vst [vmem:[%s439 + $0x1c8] sm:$0xff] %v554
                  %v556 = vld [vmem:[%s438 + $0x1d0] sm:$0xff]
                  %557 = vst [vmem:[%s439 + $0x1d0] sm:$0xff] %v556
                  %v558 = vld [vmem:[%s438 + $0x1d8] sm:$0xff]
                  %559 = vst [vmem:[%s439 + $0x1d8] sm:$0xff] %v558
                  %v560 = vld [vmem:[%s438 + $0x1e0] sm:$0xff]
                  %561 = vst [vmem:[%s439 + $0x1e0] sm:$0xff] %v560
                  %v562 = vld [vmem:[%s438 + $0x1e8] sm:$0xff]
                  %563 = vst [vmem:[%s439 + $0x1e8] sm:$0xff] %v562
                  %v564 = vld [vmem:[%s438 + $0x1f0] sm:$0xff]
                  %565 = vst [vmem:[%s439 + $0x1f0] sm:$0xff] %v564
                  %v566 = vld [vmem:[%s438 + $0x1f8] sm:$0xff]
                  %567 = vst [vmem:[%s439 + $0x1f8] sm:$0xff] %v566
                  %v568 = vld [vmem:[%s438 + $0x800] sm:$0xff]
                  %569 = vst [vmem:[%s439 + $0x200] sm:$0xff] %v568
                  %v570 = vld [vmem:[%s438 + $0x808] sm:$0xff]
                  %571 = vst [vmem:[%s439 + $0x208] sm:$0xff] %v570
                  %v572 = vld [vmem:[%s438 + $0x810] sm:$0xff]
                  %573 = vst [vmem:[%s439 + $0x210] sm:$0xff] %v572
                  %v574 = vld [vmem:[%s438 + $0x818] sm:$0xff]
                  %575 = vst [vmem:[%s439 + $0x218] sm:$0xff] %v574
                  %v576 = vld [vmem:[%s438 + $0x820] sm:$0xff]
                  %577 = vst [vmem:[%s439 + $0x220] sm:$0xff] %v576
                  %v578 = vld [vmem:[%s438 + $0x828] sm:$0xff]
                  %579 = vst [vmem:[%s439 + $0x228] sm:$0xff] %v578
                  %v580 = vld [vmem:[%s438 + $0x830] sm:$0xff]
                  %581 = vst [vmem:[%s439 + $0x230] sm:$0xff] %v580
                  %v582 = vld [vmem:[%s438 + $0x838] sm:$0xff]
                  %583 = vst [vmem:[%s439 + $0x238] sm:$0xff] %v582
                  %v584 = vld [vmem:[%s438 + $0x840] sm:$0xff]
                  %585 = vst [vmem:[%s439 + $0x240] sm:$0xff] %v584
                  %v586 = vld [vmem:[%s438 + $0x848] sm:$0xff]
                  %587 = vst [vmem:[%s439 + $0x248] sm:$0xff] %v586
                  %v588 = vld [vmem:[%s438 + $0x850] sm:$0xff]
                  %589 = vst [vmem:[%s439 + $0x250] sm:$0xff] %v588
                  %v590 = vld [vmem:[%s438 + $0x858] sm:$0xff]
                  %591 = vst [vmem:[%s439 + $0x258] sm:$0xff] %v590
                  %v592 = vld [vmem:[%s438 + $0x860] sm:$0xff]
                  %593 = vst [vmem:[%s439 + $0x260] sm:$0xff] %v592
                  %v594 = vld [vmem:[%s438 + $0x868] sm:$0xff]
                  %595 = vst [vmem:[%s439 + $0x268] sm:$0xff] %v594
                  %v596 = vld [vmem:[%s438 + $0x870] sm:$0xff]
                  %597 = vst [vmem:[%s439 + $0x270] sm:$0xff] %v596
                  %v598 = vld [vmem:[%s438 + $0x878] sm:$0xff]
                  %599 = vst [vmem:[%s439 + $0x278] sm:$0xff] %v598
                  %v600 = vld [vmem:[%s438 + $0x880] sm:$0xff]
                  %601 = vst [vmem:[%s439 + $0x280] sm:$0xff] %v600
                  %v602 = vld [vmem:[%s438 + $0x888] sm:$0xff]
                  %603 = vst [vmem:[%s439 + $0x288] sm:$0xff] %v602
                  %v604 = vld [vmem:[%s438 + $0x890] sm:$0xff]
                  %605 = vst [vmem:[%s439 + $0x290] sm:$0xff] %v604
                  %v606 = vld [vmem:[%s438 + $0x898] sm:$0xff]
                  %607 = vst [vmem:[%s439 + $0x298] sm:$0xff] %v606
                  %v608 = vld [vmem:[%s438 + $0x8a0] sm:$0xff]
                  %609 = vst [vmem:[%s439 + $0x2a0] sm:$0xff] %v608
                  %v610 = vld [vmem:[%s438 + $0x8a8] sm:$0xff]
                  %611 = vst [vmem:[%s439 + $0x2a8] sm:$0xff] %v610
                  %v612 = vld [vmem:[%s438 + $0x8b0] sm:$0xff]
                  %613 = vst [vmem:[%s439 + $0x2b0] sm:$0xff] %v612
                  %v614 = vld [vmem:[%s438 + $0x8b8] sm:$0xff]
                  %615 = vst [vmem:[%s439 + $0x2b8] sm:$0xff] %v614
                  %v616 = vld [vmem:[%s438 + $0x8c0] sm:$0xff]
                  %617 = vst [vmem:[%s439 + $0x2c0] sm:$0xff] %v616
                  %v618 = vld [vmem:[%s438 + $0x8c8] sm:$0xff]
                  %619 = vst [vmem:[%s439 + $0x2c8] sm:$0xff] %v618
                  %v620 = vld [vmem:[%s438 + $0x8d0] sm:$0xff]
                  %621 = vst [vmem:[%s439 + $0x2d0] sm:$0xff] %v620
                  %v622 = vld [vmem:[%s438 + $0x8d8] sm:$0xff]
                  %623 = vst [vmem:[%s439 + $0x2d8] sm:$0xff] %v622
                  %v624 = vld [vmem:[%s438 + $0x8e0] sm:$0xff]
                  %625 = vst [vmem:[%s439 + $0x2e0] sm:$0xff] %v624
                  %v626 = vld [vmem:[%s438 + $0x8e8] sm:$0xff]
                  %627 = vst [vmem:[%s439 + $0x2e8] sm:$0xff] %v626
                  %v628 = vld [vmem:[%s438 + $0x8f0] sm:$0xff]
                  %629 = vst [vmem:[%s439 + $0x2f0] sm:$0xff] %v628
                  %v630 = vld [vmem:[%s438 + $0x8f8] sm:$0xff]
                  %631 = vst [vmem:[%s439 + $0x2f8] sm:$0xff] %v630
                  %v632 = vld [vmem:[%s438 + $0x900] sm:$0xff]
                  %633 = vst [vmem:[%s439 + $0x300] sm:$0xff] %v632
                  %v634 = vld [vmem:[%s438 + $0x908] sm:$0xff]
                  %635 = vst [vmem:[%s439 + $0x308] sm:$0xff] %v634
                  %v636 = vld [vmem:[%s438 + $0x910] sm:$0xff]
                  %637 = vst [vmem:[%s439 + $0x310] sm:$0xff] %v636
                  %v638 = vld [vmem:[%s438 + $0x918] sm:$0xff]
                  %639 = vst [vmem:[%s439 + $0x318] sm:$0xff] %v638
                  %v640 = vld [vmem:[%s438 + $0x920] sm:$0xff]
                  %641 = vst [vmem:[%s439 + $0x320] sm:$0xff] %v640
                  %v642 = vld [vmem:[%s438 + $0x928] sm:$0xff]
                  %643 = vst [vmem:[%s439 + $0x328] sm:$0xff] %v642
                  %v644 = vld [vmem:[%s438 + $0x930] sm:$0xff]
                  %645 = vst [vmem:[%s439 + $0x330] sm:$0xff] %v644
                  %v646 = vld [vmem:[%s438 + $0x938] sm:$0xff]
                  %647 = vst [vmem:[%s439 + $0x338] sm:$0xff] %v646
                  %v648 = vld [vmem:[%s438 + $0x940] sm:$0xff]
                  %649 = vst [vmem:[%s439 + $0x340] sm:$0xff] %v648
                  %v650 = vld [vmem:[%s438 + $0x948] sm:$0xff]
                  %651 = vst [vmem:[%s439 + $0x348] sm:$0xff] %v650
                  %v652 = vld [vmem:[%s438 + $0x950] sm:$0xff]
                  %653 = vst [vmem:[%s439 + $0x350] sm:$0xff] %v652
                  %v654 = vld [vmem:[%s438 + $0x958] sm:$0xff]
                  %655 = vst [vmem:[%s439 + $0x358] sm:$0xff] %v654
                  %v656 = vld [vmem:[%s438 + $0x960] sm:$0xff]
                  %657 = vst [vmem:[%s439 + $0x360] sm:$0xff] %v656
                  %v658 = vld [vmem:[%s438 + $0x968] sm:$0xff]
                  %659 = vst [vmem:[%s439 + $0x368] sm:$0xff] %v658
                  %v660 = vld [vmem:[%s438 + $0x970] sm:$0xff]
                  %661 = vst [vmem:[%s439 + $0x370] sm:$0xff] %v660
                  %v662 = vld [vmem:[%s438 + $0x978] sm:$0xff]
                  %663 = vst [vmem:[%s439 + $0x378] sm:$0xff] %v662
                  %v664 = vld [vmem:[%s438 + $0x980] sm:$0xff]
                  %665 = vst [vmem:[%s439 + $0x380] sm:$0xff] %v664
                  %v666 = vld [vmem:[%s438 + $0x988] sm:$0xff]
                  %667 = vst [vmem:[%s439 + $0x388] sm:$0xff] %v666
                  %v668 = vld [vmem:[%s438 + $0x990] sm:$0xff]
                  %669 = vst [vmem:[%s439 + $0x390] sm:$0xff] %v668
                  %v670 = vld [vmem:[%s438 + $0x998] sm:$0xff]
                  %671 = vst [vmem:[%s439 + $0x398] sm:$0xff] %v670
                  %v672 = vld [vmem:[%s438 + $0x9a0] sm:$0xff]
                  %673 = vst [vmem:[%s439 + $0x3a0] sm:$0xff] %v672
                  %v674 = vld [vmem:[%s438 + $0x9a8] sm:$0xff]
                  %675 = vst [vmem:[%s439 + $0x3a8] sm:$0xff] %v674
                  %v676 = vld [vmem:[%s438 + $0x9b0] sm:$0xff]
                  %677 = vst [vmem:[%s439 + $0x3b0] sm:$0xff] %v676
                  %v678 = vld [vmem:[%s438 + $0x9b8] sm:$0xff]
                  %679 = vst [vmem:[%s439 + $0x3b8] sm:$0xff] %v678
                  %v680 = vld [vmem:[%s438 + $0x9c0] sm:$0xff]
                  %681 = vst [vmem:[%s439 + $0x3c0] sm:$0xff] %v680
                  %v682 = vld [vmem:[%s438 + $0x9c8] sm:$0xff]
                  %683 = vst [vmem:[%s439 + $0x3c8] sm:$0xff] %v682
                  %v684 = vld [vmem:[%s438 + $0x9d0] sm:$0xff]
                  %685 = vst [vmem:[%s439 + $0x3d0] sm:$0xff] %v684
                  %v686 = vld [vmem:[%s438 + $0x9d8] sm:$0xff]
                  %687 = vst [vmem:[%s439 + $0x3d8] sm:$0xff] %v686
                  %v688 = vld [vmem:[%s438 + $0x9e0] sm:$0xff]
                  %689 = vst [vmem:[%s439 + $0x3e0] sm:$0xff] %v688
                  %v690 = vld [vmem:[%s438 + $0x9e8] sm:$0xff]
                  %691 = vst [vmem:[%s439 + $0x3e8] sm:$0xff] %v690
                  %v692 = vld [vmem:[%s438 + $0x9f0] sm:$0xff]
                  %693 = vst [vmem:[%s439 + $0x3f0] sm:$0xff] %v692
                  %v694 = vld [vmem:[%s438 + $0x9f8] sm:$0xff]
                  %695 = vst [vmem:[%s439 + $0x3f8] sm:$0xff] %v694
                $region52: #{tpu_custom_call.1} parent=46 // loop_footer
                  %s437 = sadd.s32 1, %s433
                $region53: #{tpu_custom_call.1} parent=46 // loop_footer_branch
                  %432 = sbr.rel target = $region49
                $region54: #{tpu_custom_call.1} parent=46 // loop_exit
                  _
              $region47: #{tpu_custom_call.1} parent=31 // pred_fallthru
                _
              // Predicated region
              $region55: #{tpu_custom_call.1} parent=31 // pred_check
                _
              $region56: #{tpu_custom_call.1} parent=31 // pred_check_branch
                %697 = sbr.rel target = $region58
              $region57: #{tpu_custom_call.1} parent=31 // pred_region
                _
              $region58: #{tpu_custom_call.1} parent=31 // pred_fallthru
                _
            $region32: #{tpu_custom_call.1} parent=27 // pred_fallthru
              _
            // Predicated region
            $region33: #{tpu_custom_call.1} parent=27 // pred_check
              _
            $region34: #{tpu_custom_call.1} parent=27 // pred_check_branch
              %163 = sbr.rel target = $region36
            $region35: #{tpu_custom_call.1} parent=27 // pred_region
              %s165 = ssub.s32 256, 1
              loop: start=0, step=1, limit=1
              $region37: #{tpu_custom_call.1} parent=35 // loop_pre_header
                _
              $region38: #{tpu_custom_call.1} parent=35 // loop_header
                %s167 = sphi 0, %s171
                %p168 = scmp.ge.s32.totalorder %s167, 1
                %s172 = sphi %s157, %s157
                %s173 = sphi %s151, %s151
              $region39: #{tpu_custom_call.1} parent=35 // loop_header_branch
                %170 = sbr.rel (%p168) target = $region43
              $region40: #{tpu_custom_call.1} parent=35 // loop_body
                %v174 = vld [vmem:[%s172] sm:%s165]
                %175 = vst [vmem:[%s173] sm:%s165] %v174
                %v176 = vld [vmem:[%s172 + $0x8] sm:%s165]
                %177 = vst [vmem:[%s173 + $0x8] sm:%s165] %v176
                %v178 = vld [vmem:[%s172 + $0x10] sm:%s165]
                %179 = vst [vmem:[%s173 + $0x10] sm:%s165] %v178
                %v180 = vld [vmem:[%s172 + $0x18] sm:%s165]
                %181 = vst [vmem:[%s173 + $0x18] sm:%s165] %v180
                %v182 = vld [vmem:[%s172 + $0x20] sm:%s165]
                %183 = vst [vmem:[%s173 + $0x20] sm:%s165] %v182
                %v184 = vld [vmem:[%s172 + $0x28] sm:%s165]
                %185 = vst [vmem:[%s173 + $0x28] sm:%s165] %v184
                %v186 = vld [vmem:[%s172 + $0x30] sm:%s165]
                %187 = vst [vmem:[%s173 + $0x30] sm:%s165] %v186
                %v188 = vld [vmem:[%s172 + $0x38] sm:%s165]
                %189 = vst [vmem:[%s173 + $0x38] sm:%s165] %v188
                %v190 = vld [vmem:[%s172 + $0x40] sm:%s165]
                %191 = vst [vmem:[%s173 + $0x40] sm:%s165] %v190
                %v192 = vld [vmem:[%s172 + $0x48] sm:%s165]
                %193 = vst [vmem:[%s173 + $0x48] sm:%s165] %v192
                %v194 = vld [vmem:[%s172 + $0x50] sm:%s165]
                %195 = vst [vmem:[%s173 + $0x50] sm:%s165] %v194
                %v196 = vld [vmem:[%s172 + $0x58] sm:%s165]
                %197 = vst [vmem:[%s173 + $0x58] sm:%s165] %v196
                %v198 = vld [vmem:[%s172 + $0x60] sm:%s165]
                %199 = vst [vmem:[%s173 + $0x60] sm:%s165] %v198
                %v200 = vld [vmem:[%s172 + $0x68] sm:%s165]
                %201 = vst [vmem:[%s173 + $0x68] sm:%s165] %v200
                %v202 = vld [vmem:[%s172 + $0x70] sm:%s165]
                %203 = vst [vmem:[%s173 + $0x70] sm:%s165] %v202
                %v204 = vld [vmem:[%s172 + $0x78] sm:%s165]
                %205 = vst [vmem:[%s173 + $0x78] sm:%s165] %v204
                %v206 = vld [vmem:[%s172 + $0x80] sm:%s165]
                %207 = vst [vmem:[%s173 + $0x80] sm:%s165] %v206
                %v208 = vld [vmem:[%s172 + $0x88] sm:%s165]
                %209 = vst [vmem:[%s173 + $0x88] sm:%s165] %v208
                %v210 = vld [vmem:[%s172 + $0x90] sm:%s165]
                %211 = vst [vmem:[%s173 + $0x90] sm:%s165] %v210
                %v212 = vld [vmem:[%s172 + $0x98] sm:%s165]
                %213 = vst [vmem:[%s173 + $0x98] sm:%s165] %v212
                %v214 = vld [vmem:[%s172 + $0xa0] sm:%s165]
                %215 = vst [vmem:[%s173 + $0xa0] sm:%s165] %v214
                %v216 = vld [vmem:[%s172 + $0xa8] sm:%s165]
                %217 = vst [vmem:[%s173 + $0xa8] sm:%s165] %v216
                %v218 = vld [vmem:[%s172 + $0xb0] sm:%s165]
                %219 = vst [vmem:[%s173 + $0xb0] sm:%s165] %v218
                %v220 = vld [vmem:[%s172 + $0xb8] sm:%s165]
                %221 = vst [vmem:[%s173 + $0xb8] sm:%s165] %v220
                %v222 = vld [vmem:[%s172 + $0xc0] sm:%s165]
                %223 = vst [vmem:[%s173 + $0xc0] sm:%s165] %v222
                %v224 = vld [vmem:[%s172 + $0xc8] sm:%s165]
                %225 = vst [vmem:[%s173 + $0xc8] sm:%s165] %v224
                %v226 = vld [vmem:[%s172 + $0xd0] sm:%s165]
                %227 = vst [vmem:[%s173 + $0xd0] sm:%s165] %v226
                %v228 = vld [vmem:[%s172 + $0xd8] sm:%s165]
                %229 = vst [vmem:[%s173 + $0xd8] sm:%s165] %v228
                %v230 = vld [vmem:[%s172 + $0xe0] sm:%s165]
                %231 = vst [vmem:[%s173 + $0xe0] sm:%s165] %v230
                %v232 = vld [vmem:[%s172 + $0xe8] sm:%s165]
                %233 = vst [vmem:[%s173 + $0xe8] sm:%s165] %v232
                %v234 = vld [vmem:[%s172 + $0xf0] sm:%s165]
                %235 = vst [vmem:[%s173 + $0xf0] sm:%s165] %v234
                %v236 = vld [vmem:[%s172 + $0xf8] sm:%s165]
                %237 = vst [vmem:[%s173 + $0xf8] sm:%s165] %v236
                %v238 = vld [vmem:[%s172 + $0x100] sm:%s165]
                %239 = vst [vmem:[%s173 + $0x100] sm:%s165] %v238
                %v240 = vld [vmem:[%s172 + $0x108] sm:%s165]
                %241 = vst [vmem:[%s173 + $0x108] sm:%s165] %v240
                %v242 = vld [vmem:[%s172 + $0x110] sm:%s165]
                %243 = vst [vmem:[%s173 + $0x110] sm:%s165] %v242
                %v244 = vld [vmem:[%s172 + $0x118] sm:%s165]
                %245 = vst [vmem:[%s173 + $0x118] sm:%s165] %v244
                %v246 = vld [vmem:[%s172 + $0x120] sm:%s165]
                %247 = vst [vmem:[%s173 + $0x120] sm:%s165] %v246
                %v248 = vld [vmem:[%s172 + $0x128] sm:%s165]
                %249 = vst [vmem:[%s173 + $0x128] sm:%s165] %v248
                %v250 = vld [vmem:[%s172 + $0x130] sm:%s165]
                %251 = vst [vmem:[%s173 + $0x130] sm:%s165] %v250
                %v252 = vld [vmem:[%s172 + $0x138] sm:%s165]
                %253 = vst [vmem:[%s173 + $0x138] sm:%s165] %v252
                %v254 = vld [vmem:[%s172 + $0x140] sm:%s165]
                %255 = vst [vmem:[%s173 + $0x140] sm:%s165] %v254
                %v256 = vld [vmem:[%s172 + $0x148] sm:%s165]
                %257 = vst [vmem:[%s173 + $0x148] sm:%s165] %v256
                %v258 = vld [vmem:[%s172 + $0x150] sm:%s165]
                %259 = vst [vmem:[%s173 + $0x150] sm:%s165] %v258
                %v260 = vld [vmem:[%s172 + $0x158] sm:%s165]
                %261 = vst [vmem:[%s173 + $0x158] sm:%s165] %v260
                %v262 = vld [vmem:[%s172 + $0x160] sm:%s165]
                %263 = vst [vmem:[%s173 + $0x160] sm:%s165] %v262
                %v264 = vld [vmem:[%s172 + $0x168] sm:%s165]
                %265 = vst [vmem:[%s173 + $0x168] sm:%s165] %v264
                %v266 = vld [vmem:[%s172 + $0x170] sm:%s165]
                %267 = vst [vmem:[%s173 + $0x170] sm:%s165] %v266
                %v268 = vld [vmem:[%s172 + $0x178] sm:%s165]
                %269 = vst [vmem:[%s173 + $0x178] sm:%s165] %v268
                %v270 = vld [vmem:[%s172 + $0x180] sm:%s165]
                %271 = vst [vmem:[%s173 + $0x180] sm:%s165] %v270
                %v272 = vld [vmem:[%s172 + $0x188] sm:%s165]
                %273 = vst [vmem:[%s173 + $0x188] sm:%s165] %v272
                %v274 = vld [vmem:[%s172 + $0x190] sm:%s165]
                %275 = vst [vmem:[%s173 + $0x190] sm:%s165] %v274
                %v276 = vld [vmem:[%s172 + $0x198] sm:%s165]
                %277 = vst [vmem:[%s173 + $0x198] sm:%s165] %v276
                %v278 = vld [vmem:[%s172 + $0x1a0] sm:%s165]
                %279 = vst [vmem:[%s173 + $0x1a0] sm:%s165] %v278
                %v280 = vld [vmem:[%s172 + $0x1a8] sm:%s165]
                %281 = vst [vmem:[%s173 + $0x1a8] sm:%s165] %v280
                %v282 = vld [vmem:[%s172 + $0x1b0] sm:%s165]
                %283 = vst [vmem:[%s173 + $0x1b0] sm:%s165] %v282
                %v284 = vld [vmem:[%s172 + $0x1b8] sm:%s165]
                %285 = vst [vmem:[%s173 + $0x1b8] sm:%s165] %v284
                %v286 = vld [vmem:[%s172 + $0x1c0] sm:%s165]
                %287 = vst [vmem:[%s173 + $0x1c0] sm:%s165] %v286
                %v288 = vld [vmem:[%s172 + $0x1c8] sm:%s165]
                %289 = vst [vmem:[%s173 + $0x1c8] sm:%s165] %v288
                %v290 = vld [vmem:[%s172 + $0x1d0] sm:%s165]
                %291 = vst [vmem:[%s173 + $0x1d0] sm:%s165] %v290
                %v292 = vld [vmem:[%s172 + $0x1d8] sm:%s165]
                %293 = vst [vmem:[%s173 + $0x1d8] sm:%s165] %v292
                %v294 = vld [vmem:[%s172 + $0x1e0] sm:%s165]
                %295 = vst [vmem:[%s173 + $0x1e0] sm:%s165] %v294
                %v296 = vld [vmem:[%s172 + $0x1e8] sm:%s165]
                %297 = vst [vmem:[%s173 + $0x1e8] sm:%s165] %v296
                %v298 = vld [vmem:[%s172 + $0x1f0] sm:%s165]
                %299 = vst [vmem:[%s173 + $0x1f0] sm:%s165] %v298
                %v300 = vld [vmem:[%s172 + $0x1f8] sm:%s165]
                %301 = vst [vmem:[%s173 + $0x1f8] sm:%s165] %v300
                %v302 = vld [vmem:[%s172 + $0x800] sm:%s165]
                %303 = vst [vmem:[%s173 + $0x200] sm:%s165] %v302
                %v304 = vld [vmem:[%s172 + $0x808] sm:%s165]
                %305 = vst [vmem:[%s173 + $0x208] sm:%s165] %v304
                %v306 = vld [vmem:[%s172 + $0x810] sm:%s165]
                %307 = vst [vmem:[%s173 + $0x210] sm:%s165] %v306
                %v308 = vld [vmem:[%s172 + $0x818] sm:%s165]
                %309 = vst [vmem:[%s173 + $0x218] sm:%s165] %v308
                %v310 = vld [vmem:[%s172 + $0x820] sm:%s165]
                %311 = vst [vmem:[%s173 + $0x220] sm:%s165] %v310
                %v312 = vld [vmem:[%s172 + $0x828] sm:%s165]
                %313 = vst [vmem:[%s173 + $0x228] sm:%s165] %v312
                %v314 = vld [vmem:[%s172 + $0x830] sm:%s165]
                %315 = vst [vmem:[%s173 + $0x230] sm:%s165] %v314
                %v316 = vld [vmem:[%s172 + $0x838] sm:%s165]
                %317 = vst [vmem:[%s173 + $0x238] sm:%s165] %v316
                %v318 = vld [vmem:[%s172 + $0x840] sm:%s165]
                %319 = vst [vmem:[%s173 + $0x240] sm:%s165] %v318
                %v320 = vld [vmem:[%s172 + $0x848] sm:%s165]
                %321 = vst [vmem:[%s173 + $0x248] sm:%s165] %v320
                %v322 = vld [vmem:[%s172 + $0x850] sm:%s165]
                %323 = vst [vmem:[%s173 + $0x250] sm:%s165] %v322
                %v324 = vld [vmem:[%s172 + $0x858] sm:%s165]
                %325 = vst [vmem:[%s173 + $0x258] sm:%s165] %v324
                %v326 = vld [vmem:[%s172 + $0x860] sm:%s165]
                %327 = vst [vmem:[%s173 + $0x260] sm:%s165] %v326
                %v328 = vld [vmem:[%s172 + $0x868] sm:%s165]
                %329 = vst [vmem:[%s173 + $0x268] sm:%s165] %v328
                %v330 = vld [vmem:[%s172 + $0x870] sm:%s165]
                %331 = vst [vmem:[%s173 + $0x270] sm:%s165] %v330
                %v332 = vld [vmem:[%s172 + $0x878] sm:%s165]
                %333 = vst [vmem:[%s173 + $0x278] sm:%s165] %v332
                %v334 = vld [vmem:[%s172 + $0x880] sm:%s165]
                %335 = vst [vmem:[%s173 + $0x280] sm:%s165] %v334
                %v336 = vld [vmem:[%s172 + $0x888] sm:%s165]
                %337 = vst [vmem:[%s173 + $0x288] sm:%s165] %v336
                %v338 = vld [vmem:[%s172 + $0x890] sm:%s165]
                %339 = vst [vmem:[%s173 + $0x290] sm:%s165] %v338
                %v340 = vld [vmem:[%s172 + $0x898] sm:%s165]
                %341 = vst [vmem:[%s173 + $0x298] sm:%s165] %v340
                %v342 = vld [vmem:[%s172 + $0x8a0] sm:%s165]
                %343 = vst [vmem:[%s173 + $0x2a0] sm:%s165] %v342
                %v344 = vld [vmem:[%s172 + $0x8a8] sm:%s165]
                %345 = vst [vmem:[%s173 + $0x2a8] sm:%s165] %v344
                %v346 = vld [vmem:[%s172 + $0x8b0] sm:%s165]
                %347 = vst [vmem:[%s173 + $0x2b0] sm:%s165] %v346
                %v348 = vld [vmem:[%s172 + $0x8b8] sm:%s165]
                %349 = vst [vmem:[%s173 + $0x2b8] sm:%s165] %v348
                %v350 = vld [vmem:[%s172 + $0x8c0] sm:%s165]
                %351 = vst [vmem:[%s173 + $0x2c0] sm:%s165] %v350
                %v352 = vld [vmem:[%s172 + $0x8c8] sm:%s165]
                %353 = vst [vmem:[%s173 + $0x2c8] sm:%s165] %v352
                %v354 = vld [vmem:[%s172 + $0x8d0] sm:%s165]
                %355 = vst [vmem:[%s173 + $0x2d0] sm:%s165] %v354
                %v356 = vld [vmem:[%s172 + $0x8d8] sm:%s165]
                %357 = vst [vmem:[%s173 + $0x2d8] sm:%s165] %v356
                %v358 = vld [vmem:[%s172 + $0x8e0] sm:%s165]
                %359 = vst [vmem:[%s173 + $0x2e0] sm:%s165] %v358
                %v360 = vld [vmem:[%s172 + $0x8e8] sm:%s165]
                %361 = vst [vmem:[%s173 + $0x2e8] sm:%s165] %v360
                %v362 = vld [vmem:[%s172 + $0x8f0] sm:%s165]
                %363 = vst [vmem:[%s173 + $0x2f0] sm:%s165] %v362
                %v364 = vld [vmem:[%s172 + $0x8f8] sm:%s165]
                %365 = vst [vmem:[%s173 + $0x2f8] sm:%s165] %v364
                %v366 = vld [vmem:[%s172 + $0x900] sm:%s165]
                %367 = vst [vmem:[%s173 + $0x300] sm:%s165] %v366
                %v368 = vld [vmem:[%s172 + $0x908] sm:%s165]
                %369 = vst [vmem:[%s173 + $0x308] sm:%s165] %v368
                %v370 = vld [vmem:[%s172 + $0x910] sm:%s165]
                %371 = vst [vmem:[%s173 + $0x310] sm:%s165] %v370
                %v372 = vld [vmem:[%s172 + $0x918] sm:%s165]
                %373 = vst [vmem:[%s173 + $0x318] sm:%s165] %v372
                %v374 = vld [vmem:[%s172 + $0x920] sm:%s165]
                %375 = vst [vmem:[%s173 + $0x320] sm:%s165] %v374
                %v376 = vld [vmem:[%s172 + $0x928] sm:%s165]
                %377 = vst [vmem:[%s173 + $0x328] sm:%s165] %v376
                %v378 = vld [vmem:[%s172 + $0x930] sm:%s165]
                %379 = vst [vmem:[%s173 + $0x330] sm:%s165] %v378
                %v380 = vld [vmem:[%s172 + $0x938] sm:%s165]
                %381 = vst [vmem:[%s173 + $0x338] sm:%s165] %v380
                %v382 = vld [vmem:[%s172 + $0x940] sm:%s165]
                %383 = vst [vmem:[%s173 + $0x340] sm:%s165] %v382
                %v384 = vld [vmem:[%s172 + $0x948] sm:%s165]
                %385 = vst [vmem:[%s173 + $0x348] sm:%s165] %v384
                %v386 = vld [vmem:[%s172 + $0x950] sm:%s165]
                %387 = vst [vmem:[%s173 + $0x350] sm:%s165] %v386
                %v388 = vld [vmem:[%s172 + $0x958] sm:%s165]
                %389 = vst [vmem:[%s173 + $0x358] sm:%s165] %v388
                %v390 = vld [vmem:[%s172 + $0x960] sm:%s165]
                %391 = vst [vmem:[%s173 + $0x360] sm:%s165] %v390
                %v392 = vld [vmem:[%s172 + $0x968] sm:%s165]
                %393 = vst [vmem:[%s173 + $0x368] sm:%s165] %v392
                %v394 = vld [vmem:[%s172 + $0x970] sm:%s165]
                %395 = vst [vmem:[%s173 + $0x370] sm:%s165] %v394
                %v396 = vld [vmem:[%s172 + $0x978] sm:%s165]
                %397 = vst [vmem:[%s173 + $0x378] sm:%s165] %v396
                %v398 = vld [vmem:[%s172 + $0x980] sm:%s165]
                %399 = vst [vmem:[%s173 + $0x380] sm:%s165] %v398
                %v400 = vld [vmem:[%s172 + $0x988] sm:%s165]
                %401 = vst [vmem:[%s173 + $0x388] sm:%s165] %v400
                %v402 = vld [vmem:[%s172 + $0x990] sm:%s165]
                %403 = vst [vmem:[%s173 + $0x390] sm:%s165] %v402
                %v404 = vld [vmem:[%s172 + $0x998] sm:%s165]
                %405 = vst [vmem:[%s173 + $0x398] sm:%s165] %v404
                %v406 = vld [vmem:[%s172 + $0x9a0] sm:%s165]
                %407 = vst [vmem:[%s173 + $0x3a0] sm:%s165] %v406
                %v408 = vld [vmem:[%s172 + $0x9a8] sm:%s165]
                %409 = vst [vmem:[%s173 + $0x3a8] sm:%s165] %v408
                %v410 = vld [vmem:[%s172 + $0x9b0] sm:%s165]
                %411 = vst [vmem:[%s173 + $0x3b0] sm:%s165] %v410
                %v412 = vld [vmem:[%s172 + $0x9b8] sm:%s165]
                %413 = vst [vmem:[%s173 + $0x3b8] sm:%s165] %v412
                %v414 = vld [vmem:[%s172 + $0x9c0] sm:%s165]
                %415 = vst [vmem:[%s173 + $0x3c0] sm:%s165] %v414
                %v416 = vld [vmem:[%s172 + $0x9c8] sm:%s165]
                %417 = vst [vmem:[%s173 + $0x3c8] sm:%s165] %v416
                %v418 = vld [vmem:[%s172 + $0x9d0] sm:%s165]
                %419 = vst [vmem:[%s173 + $0x3d0] sm:%s165] %v418
                %v420 = vld [vmem:[%s172 + $0x9d8] sm:%s165]
                %421 = vst [vmem:[%s173 + $0x3d8] sm:%s165] %v420
                %v422 = vld [vmem:[%s172 + $0x9e0] sm:%s165]
                %423 = vst [vmem:[%s173 + $0x3e0] sm:%s165] %v422
                %v424 = vld [vmem:[%s172 + $0x9e8] sm:%s165]
                %425 = vst [vmem:[%s173 + $0x3e8] sm:%s165] %v424
                %v426 = vld [vmem:[%s172 + $0x9f0] sm:%s165]
                %427 = vst [vmem:[%s173 + $0x3f0] sm:%s165] %v426
                %v428 = vld [vmem:[%s172 + $0x9f8] sm:%s165]
                %429 = vst [vmem:[%s173 + $0x3f8] sm:%s165] %v428
              $region41: #{tpu_custom_call.1} parent=35 // loop_footer
                %s171 = sadd.s32 1, %s167
              $region42: #{tpu_custom_call.1} parent=35 // loop_footer_branch
                %166 = sbr.rel target = $region38
              $region43: #{tpu_custom_call.1} parent=35 // loop_exit
                _
            $region36: #{tpu_custom_call.1} parent=27 // pred_fallthru
              _
          $region28: #{tpu_custom_call.1} parent=23 // pred_fallthru
            _
          %698 = vnop
        $region24: #{tpu_custom_call.1} parent=19 // pred_fallthru
          _
        // Predicated region
        $region59: #{tpu_custom_call.1} parent=19 // pred_check
          %p699 = pneg %p70
        $region60: #{tpu_custom_call.1} parent=19 // pred_check_branch
          %701 = sbr.rel (%p699) target = $region62
        $region61: #{tpu_custom_call.1} parent=19 // pred_region
          %s702 = smul.u32 64, %s18
          %p703 = scmp.lt.s32.totalorder %s702, 255
          %s704 = scalar_select %p703, %s702, 255
          %s705 = smul.addr %s704, 8
          %s706 = scalar_lea.vmem %s1, %s705
          %s707 = smul.u32 64, %s18
        $region62: #{tpu_custom_call.1} parent=19 // pred_fallthru
          _
      $region20: #{tpu_custom_call.1} parent=5 // pred_fallthru
        _
      %p708 = scmp.le.s32.totalorder 1, %s10
      %p709 = scmp.lt.s32.totalorder %s10, 5
      %p710 = pnand %p708, %p709
      %p711 = pneg %p710
      // Predicated region
      $region63: #{tpu_custom_call.1} parent=5 // pred_check
        _
      $region64: #{tpu_custom_call.1} parent=5 // pred_check_branch
        %713 = sbr.rel (%p710) target = $region66
      $region65: #{tpu_custom_call.1} parent=5 // pred_region
        %s714 = ssub.s32 %s10, 1
        %s715 = sand.u32 %s37, 1
        %s716 = sand.u32 %s37, 1
        %s717 = smul.addr %s716, 1024
        %s718 = scalar_lea.vmem [#allocation3], %s717
        // Predicated region
        $region67: #{tpu_custom_call.1} parent=65 // pred_check
          %p719 = pneg %p50
        $region68: #{tpu_custom_call.1} parent=65 // pred_check_branch
          %721 = sbr.rel (%p719) target = $region70
        $region69: #{tpu_custom_call.1} parent=65 // pred_region
          _
        $region70: #{tpu_custom_call.1} parent=65 // pred_fallthru
          _
        %s722 = sand.u32 %s37, 1
        %s723 = sand.u32 %s37, 1
        %s724 = smul.addr %s723, 1024
        %s725 = scalar_lea.vmem [#allocation3], %s724
        %p726 = pneg %p50
        %p727 = pneg %p47
        %s728 = smul.u32 64, %s20
        %p729 = scmp.lt.s32.totalorder %s728, 255
        %s730 = scalar_select %p729, %s728, 255
        %s731 = smul.addr %s730, 8
        %s732 = scalar_lea.vmem %s1, %s731
        %p733 = pneg %p76
        %p734 = pneg %p73
        %p735 = pneg %p97
        %p736 = pneg %p94
        %p737 = pneg %p123
        %p738 = pneg %p120
        %s739 = smul.u32 2, %s19
        %s740 = smul.u32 64, %s20
        %s741 = smul.u32 64, %s20
        %p742 = scmp.lt.s32.totalorder %s741, 255
        %s743 = scalar_select %p742, %s741, 255
        %s744 = smul.addr %s743, 8
        %s745 = scalar_lea.vmem %s1, %s744
        %s746 = smul.u32 64, %s20
        %p747 = scmp.eq.s32.totalorder %s20, 0
        // Predicated region
        $region71: #{tpu_custom_call.1} parent=65 // pred_check
          %p748 = pneg %p747
        $region72: #{tpu_custom_call.1} parent=65 // pred_check_branch
          %750 = sbr.rel (%p748) target = $region74
        $region73: #{tpu_custom_call.1} parent=65 // pred_region
          %751 = vst [vmem:[#allocation2] sm:$0x3] 0.0
        $region74: #{tpu_custom_call.1} parent=65 // pred_fallthru
          _
        %v752 = vld [vmem:[%s718] sm:$0xff]
        %v753 = vld [vmem:[%s718 + $0x8] sm:$0xff]
        %v754 = vld [vmem:[%s718 + $0x10] sm:$0xff]
        %v755 = vld [vmem:[%s718 + $0x18] sm:$0xff]
        %v756 = vld [vmem:[%s718 + $0x20] sm:$0xff]
        %v757 = vld [vmem:[%s718 + $0x28] sm:$0xff]
        %v758 = vld [vmem:[%s718 + $0x30] sm:$0xff]
        %v759 = vld [vmem:[%s718 + $0x38] sm:$0xff]
        %v760 = vld [vmem:[%s718 + $0x40] sm:$0xff]
        %v761 = vld [vmem:[%s718 + $0x48] sm:$0xff]
        %v762 = vld [vmem:[%s718 + $0x50] sm:$0xff]
        %v763 = vld [vmem:[%s718 + $0x58] sm:$0xff]
        %v764 = vld [vmem:[%s718 + $0x60] sm:$0xff]
        %v765 = vld [vmem:[%s718 + $0x68] sm:$0xff]
        %v766 = vld [vmem:[%s718 + $0x70] sm:$0xff]
        %v767 = vld [vmem:[%s718 + $0x78] sm:$0xff]
        %v768 = vld [vmem:[%s718 + $0x80] sm:$0xff]
        %v769 = vld [vmem:[%s718 + $0x88] sm:$0xff]
        %v770 = vld [vmem:[%s718 + $0x90] sm:$0xff]
        %v771 = vld [vmem:[%s718 + $0x98] sm:$0xff]
        %v772 = vld [vmem:[%s718 + $0xa0] sm:$0xff]
        %v773 = vld [vmem:[%s718 + $0xa8] sm:$0xff]
        %v774 = vld [vmem:[%s718 + $0xb0] sm:$0xff]
        %v775 = vld [vmem:[%s718 + $0xb8] sm:$0xff]
        %v776 = vld [vmem:[%s718 + $0xc0] sm:$0xff]
        %v777 = vld [vmem:[%s718 + $0xc8] sm:$0xff]
        %v778 = vld [vmem:[%s718 + $0xd0] sm:$0xff]
        %v779 = vld [vmem:[%s718 + $0xd8] sm:$0xff]
        %v780 = vld [vmem:[%s718 + $0xe0] sm:$0xff]
        %v781 = vld [vmem:[%s718 + $0xe8] sm:$0xff]
        %v782 = vld [vmem:[%s718 + $0xf0] sm:$0xff]
        %v783 = vld [vmem:[%s718 + $0xf8] sm:$0xff]
        %v784 = vld [vmem:[%s718 + $0x100] sm:$0xff]
        %v785 = vld [vmem:[%s718 + $0x108] sm:$0xff]
        %v786 = vld [vmem:[%s718 + $0x110] sm:$0xff]
        %v787 = vld [vmem:[%s718 + $0x118] sm:$0xff]
        %v788 = vld [vmem:[%s718 + $0x120] sm:$0xff]
        %v789 = vld [vmem:[%s718 + $0x128] sm:$0xff]
        %v790 = vld [vmem:[%s718 + $0x130] sm:$0xff]
        %v791 = vld [vmem:[%s718 + $0x138] sm:$0xff]
        %v792 = vld [vmem:[%s718 + $0x140] sm:$0xff]
        %v793 = vld [vmem:[%s718 + $0x148] sm:$0xff]
        %v794 = vld [vmem:[%s718 + $0x150] sm:$0xff]
        %v795 = vld [vmem:[%s718 + $0x158] sm:$0xff]
        %v796 = vld [vmem:[%s718 + $0x160] sm:$0xff]
        %v797 = vld [vmem:[%s718 + $0x168] sm:$0xff]
        %v798 = vld [vmem:[%s718 + $0x170] sm:$0xff]
        %v799 = vld [vmem:[%s718 + $0x178] sm:$0xff]
        %v800 = vld [vmem:[%s718 + $0x180] sm:$0xff]
        %v801 = vld [vmem:[%s718 + $0x188] sm:$0xff]
        %v802 = vld [vmem:[%s718 + $0x190] sm:$0xff]
        %v803 = vld [vmem:[%s718 + $0x198] sm:$0xff]
        %v804 = vld [vmem:[%s718 + $0x1a0] sm:$0xff]
        %v805 = vld [vmem:[%s718 + $0x1a8] sm:$0xff]
        %v806 = vld [vmem:[%s718 + $0x1b0] sm:$0xff]
        %v807 = vld [vmem:[%s718 + $0x1b8] sm:$0xff]
        %v808 = vld [vmem:[%s718 + $0x1c0] sm:$0xff]
        %v809 = vld [vmem:[%s718 + $0x1c8] sm:$0xff]
        %v810 = vld [vmem:[%s718 + $0x1d0] sm:$0xff]
        %v811 = vld [vmem:[%s718 + $0x1d8] sm:$0xff]
        %v812 = vld [vmem:[%s718 + $0x1e0] sm:$0xff]
        %v813 = vld [vmem:[%s718 + $0x1e8] sm:$0xff]
        %v814 = vld [vmem:[%s718 + $0x1f0] sm:$0xff]
        %v815 = vld [vmem:[%s718 + $0x1f8] sm:$0xff]
        %v816 = vld [vmem:[%s718 + $0x200] sm:$0xff]
        %v817 = vld [vmem:[%s718 + $0x208] sm:$0xff]
        %v818 = vld [vmem:[%s718 + $0x210] sm:$0xff]
        %v819 = vld [vmem:[%s718 + $0x218] sm:$0xff]
        %v820 = vld [vmem:[%s718 + $0x220] sm:$0xff]
        %v821 = vld [vmem:[%s718 + $0x228] sm:$0xff]
        %v822 = vld [vmem:[%s718 + $0x230] sm:$0xff]
        %v823 = vld [vmem:[%s718 + $0x238] sm:$0xff]
        %v824 = vld [vmem:[%s718 + $0x240] sm:$0xff]
        %v825 = vld [vmem:[%s718 + $0x248] sm:$0xff]
        %v826 = vld [vmem:[%s718 + $0x250] sm:$0xff]
        %v827 = vld [vmem:[%s718 + $0x258] sm:$0xff]
        %v828 = vld [vmem:[%s718 + $0x260] sm:$0xff]
        %v829 = vld [vmem:[%s718 + $0x268] sm:$0xff]
        %v830 = vld [vmem:[%s718 + $0x270] sm:$0xff]
        %v831 = vld [vmem:[%s718 + $0x278] sm:$0xff]
        %v832 = vld [vmem:[%s718 + $0x280] sm:$0xff]
        %v833 = vld [vmem:[%s718 + $0x288] sm:$0xff]
        %v834 = vld [vmem:[%s718 + $0x290] sm:$0xff]
        %v835 = vld [vmem:[%s718 + $0x298] sm:$0xff]
        %v836 = vld [vmem:[%s718 + $0x2a0] sm:$0xff]
        %v837 = vld [vmem:[%s718 + $0x2a8] sm:$0xff]
        %v838 = vld [vmem:[%s718 + $0x2b0] sm:$0xff]
        %v839 = vld [vmem:[%s718 + $0x2b8] sm:$0xff]
        %v840 = vld [vmem:[%s718 + $0x2c0] sm:$0xff]
        %v841 = vld [vmem:[%s718 + $0x2c8] sm:$0xff]
        %v842 = vld [vmem:[%s718 + $0x2d0] sm:$0xff]
        %v843 = vld [vmem:[%s718 + $0x2d8] sm:$0xff]
        %v844 = vld [vmem:[%s718 + $0x2e0] sm:$0xff]
        %v845 = vld [vmem:[%s718 + $0x2e8] sm:$0xff]
        %v846 = vld [vmem:[%s718 + $0x2f0] sm:$0xff]
        %v847 = vld [vmem:[%s718 + $0x2f8] sm:$0xff]
        %v848 = vld [vmem:[%s718 + $0x300] sm:$0xff]
        %v849 = vld [vmem:[%s718 + $0x308] sm:$0xff]
        %v850 = vld [vmem:[%s718 + $0x310] sm:$0xff]
        %v851 = vld [vmem:[%s718 + $0x318] sm:$0xff]
        %v852 = vld [vmem:[%s718 + $0x320] sm:$0xff]
        %v853 = vld [vmem:[%s718 + $0x328] sm:$0xff]
        %v854 = vld [vmem:[%s718 + $0x330] sm:$0xff]
        %v855 = vld [vmem:[%s718 + $0x338] sm:$0xff]
        %v856 = vld [vmem:[%s718 + $0x340] sm:$0xff]
        %v857 = vld [vmem:[%s718 + $0x348] sm:$0xff]
        %v858 = vld [vmem:[%s718 + $0x350] sm:$0xff]
        %v859 = vld [vmem:[%s718 + $0x358] sm:$0xff]
        %v860 = vld [vmem:[%s718 + $0x360] sm:$0xff]
        %v861 = vld [vmem:[%s718 + $0x368] sm:$0xff]
        %v862 = vld [vmem:[%s718 + $0x370] sm:$0xff]
        %v863 = vld [vmem:[%s718 + $0x378] sm:$0xff]
        %v864 = vld [vmem:[%s718 + $0x380] sm:$0xff]
        %v865 = vld [vmem:[%s718 + $0x388] sm:$0xff]
        %v866 = vld [vmem:[%s718 + $0x390] sm:$0xff]
        %v867 = vld [vmem:[%s718 + $0x398] sm:$0xff]
        %v868 = vld [vmem:[%s718 + $0x3a0] sm:$0xff]
        %v869 = vld [vmem:[%s718 + $0x3a8] sm:$0xff]
        %v870 = vld [vmem:[%s718 + $0x3b0] sm:$0xff]
        %v871 = vld [vmem:[%s718 + $0x3b8] sm:$0xff]
        %v872 = vld [vmem:[%s718 + $0x3c0] sm:$0xff]
        %v873 = vld [vmem:[%s718 + $0x3c8] sm:$0xff]
        %v874 = vld [vmem:[%s718 + $0x3d0] sm:$0xff]
        %v875 = vld [vmem:[%s718 + $0x3d8] sm:$0xff]
        %v876 = vld [vmem:[%s718 + $0x3e0] sm:$0xff]
        %v877 = vld [vmem:[%s718 + $0x3e8] sm:$0xff]
        %v878 = vld [vmem:[%s718 + $0x3f0] sm:$0xff]
        %v879 = vld [vmem:[%s718 + $0x3f8] sm:$0xff]
        %vm880 = vcmask 523264
        %v881 = vsel %vm880, %v752, 0.0
        %882 = vadd.xlane.f32.xlu0 %v881
        %v883 = vpop.xlane.xlu0 %882
        %v884 = vsel %vm880, %v753, 0.0
        %885 = vadd.xlane.f32.xlu0 %v884
        %v886 = vpop.xlane.xlu0 %885
        %v887 = vsel %vm880, %v754, 0.0
        %888 = vadd.xlane.f32.xlu0 %v887
        %v889 = vpop.xlane.xlu0 %888
        %v890 = vsel %vm880, %v755, 0.0
        %891 = vadd.xlane.f32.xlu0 %v890
        %v892 = vpop.xlane.xlu0 %891
        %v893 = vsel %vm880, %v756, 0.0
        %894 = vadd.xlane.f32.xlu0 %v893
        %v895 = vpop.xlane.xlu0 %894
        %v896 = vsel %vm880, %v757, 0.0
        %897 = vadd.xlane.f32.xlu0 %v896
        %v898 = vpop.xlane.xlu0 %897
        %v899 = vsel %vm880, %v758, 0.0
        %900 = vadd.xlane.f32.xlu0 %v899
        %v901 = vpop.xlane.xlu0 %900
        %v902 = vsel %vm880, %v759, 0.0
        %903 = vadd.xlane.f32.xlu0 %v902
        %v904 = vpop.xlane.xlu0 %903
        %v905 = vsel %vm880, %v760, 0.0
        %906 = vadd.xlane.f32.xlu0 %v905
        %v907 = vpop.xlane.xlu0 %906
        %v908 = vsel %vm880, %v761, 0.0
        %909 = vadd.xlane.f32.xlu0 %v908
        %v910 = vpop.xlane.xlu0 %909
        %v911 = vsel %vm880, %v762, 0.0
        %912 = vadd.xlane.f32.xlu0 %v911
        %v913 = vpop.xlane.xlu0 %912
        %v914 = vsel %vm880, %v763, 0.0
        %915 = vadd.xlane.f32.xlu0 %v914
        %v916 = vpop.xlane.xlu0 %915
        %v917 = vsel %vm880, %v764, 0.0
        %918 = vadd.xlane.f32.xlu0 %v917
        %v919 = vpop.xlane.xlu0 %918
        %v920 = vsel %vm880, %v765, 0.0
        %921 = vadd.xlane.f32.xlu0 %v920
        %v922 = vpop.xlane.xlu0 %921
        %v923 = vsel %vm880, %v766, 0.0
        %924 = vadd.xlane.f32.xlu0 %v923
        %v925 = vpop.xlane.xlu0 %924
        %v926 = vsel %vm880, %v767, 0.0
        %927 = vadd.xlane.f32.xlu0 %v926
        %v928 = vpop.xlane.xlu0 %927
        %v929 = vsel %vm880, %v768, 0.0
        %930 = vadd.xlane.f32.xlu0 %v929
        %v931 = vpop.xlane.xlu0 %930
        %v932 = vsel %vm880, %v769, 0.0
        %933 = vadd.xlane.f32.xlu0 %v932
        %v934 = vpop.xlane.xlu0 %933
        %v935 = vsel %vm880, %v770, 0.0
        %936 = vadd.xlane.f32.xlu0 %v935
        %v937 = vpop.xlane.xlu0 %936
        %v938 = vsel %vm880, %v771, 0.0
        %939 = vadd.xlane.f32.xlu0 %v938
        %v940 = vpop.xlane.xlu0 %939
        %v941 = vsel %vm880, %v772, 0.0
        %942 = vadd.xlane.f32.xlu0 %v941
        %v943 = vpop.xlane.xlu0 %942
        %v944 = vsel %vm880, %v773, 0.0
        %945 = vadd.xlane.f32.xlu0 %v944
        %v946 = vpop.xlane.xlu0 %945
        %v947 = vsel %vm880, %v774, 0.0
        %948 = vadd.xlane.f32.xlu0 %v947
        %v949 = vpop.xlane.xlu0 %948
        %v950 = vsel %vm880, %v775, 0.0
        %951 = vadd.xlane.f32.xlu0 %v950
        %v952 = vpop.xlane.xlu0 %951
        %v953 = vsel %vm880, %v776, 0.0
        %954 = vadd.xlane.f32.xlu0 %v953
        %v955 = vpop.xlane.xlu0 %954
        %v956 = vsel %vm880, %v777, 0.0
        %957 = vadd.xlane.f32.xlu0 %v956
        %v958 = vpop.xlane.xlu0 %957
        %v959 = vsel %vm880, %v778, 0.0
        %960 = vadd.xlane.f32.xlu0 %v959
        %v961 = vpop.xlane.xlu0 %960
        %v962 = vsel %vm880, %v779, 0.0
        %963 = vadd.xlane.f32.xlu0 %v962
        %v964 = vpop.xlane.xlu0 %963
        %v965 = vsel %vm880, %v780, 0.0
        %966 = vadd.xlane.f32.xlu0 %v965
        %v967 = vpop.xlane.xlu0 %966
        %v968 = vsel %vm880, %v781, 0.0
        %969 = vadd.xlane.f32.xlu0 %v968
        %v970 = vpop.xlane.xlu0 %969
        %v971 = vsel %vm880, %v782, 0.0
        %972 = vadd.xlane.f32.xlu0 %v971
        %v973 = vpop.xlane.xlu0 %972
        %v974 = vsel %vm880, %v783, 0.0
        %975 = vadd.xlane.f32.xlu0 %v974
        %v976 = vpop.xlane.xlu0 %975
        %v977 = vsel %vm880, %v784, 0.0
        %978 = vadd.xlane.f32.xlu0 %v977
        %v979 = vpop.xlane.xlu0 %978
        %v980 = vsel %vm880, %v785, 0.0
        %981 = vadd.xlane.f32.xlu0 %v980
        %v982 = vpop.xlane.xlu0 %981
        %v983 = vsel %vm880, %v786, 0.0
        %984 = vadd.xlane.f32.xlu0 %v983
        %v985 = vpop.xlane.xlu0 %984
        %v986 = vsel %vm880, %v787, 0.0
        %987 = vadd.xlane.f32.xlu0 %v986
        %v988 = vpop.xlane.xlu0 %987
        %v989 = vsel %vm880, %v788, 0.0
        %990 = vadd.xlane.f32.xlu0 %v989
        %v991 = vpop.xlane.xlu0 %990
        %v992 = vsel %vm880, %v789, 0.0
        %993 = vadd.xlane.f32.xlu0 %v992
        %v994 = vpop.xlane.xlu0 %993
        %v995 = vsel %vm880, %v790, 0.0
        %996 = vadd.xlane.f32.xlu0 %v995
        %v997 = vpop.xlane.xlu0 %996
        %v998 = vsel %vm880, %v791, 0.0
        %999 = vadd.xlane.f32.xlu0 %v998
        %v1000 = vpop.xlane.xlu0 %999
        %v1001 = vsel %vm880, %v792, 0.0
        %1002 = vadd.xlane.f32.xlu0 %v1001
        %v1003 = vpop.xlane.xlu0 %1002
        %v1004 = vsel %vm880, %v793, 0.0
        %1005 = vadd.xlane.f32.xlu0 %v1004
        %v1006 = vpop.xlane.xlu0 %1005
        %v1007 = vsel %vm880, %v794, 0.0
        %1008 = vadd.xlane.f32.xlu0 %v1007
        %v1009 = vpop.xlane.xlu0 %1008
        %v1010 = vsel %vm880, %v795, 0.0
        %1011 = vadd.xlane.f32.xlu0 %v1010
        %v1012 = vpop.xlane.xlu0 %1011
        %v1013 = vsel %vm880, %v796, 0.0
        %1014 = vadd.xlane.f32.xlu0 %v1013
        %v1015 = vpop.xlane.xlu0 %1014
        %v1016 = vsel %vm880, %v797, 0.0
        %1017 = vadd.xlane.f32.xlu0 %v1016
        %v1018 = vpop.xlane.xlu0 %1017
        %v1019 = vsel %vm880, %v798, 0.0
        %1020 = vadd.xlane.f32.xlu0 %v1019
        %v1021 = vpop.xlane.xlu0 %1020
        %v1022 = vsel %vm880, %v799, 0.0
        %1023 = vadd.xlane.f32.xlu0 %v1022
        %v1024 = vpop.xlane.xlu0 %1023
        %v1025 = vsel %vm880, %v800, 0.0
        %1026 = vadd.xlane.f32.xlu0 %v1025
        %v1027 = vpop.xlane.xlu0 %1026
        %v1028 = vsel %vm880, %v801, 0.0
        %1029 = vadd.xlane.f32.xlu0 %v1028
        %v1030 = vpop.xlane.xlu0 %1029
        %v1031 = vsel %vm880, %v802, 0.0
        %1032 = vadd.xlane.f32.xlu0 %v1031
        %v1033 = vpop.xlane.xlu0 %1032
        %v1034 = vsel %vm880, %v803, 0.0
        %1035 = vadd.xlane.f32.xlu0 %v1034
        %v1036 = vpop.xlane.xlu0 %1035
        %v1037 = vsel %vm880, %v804, 0.0
        %1038 = vadd.xlane.f32.xlu0 %v1037
        %v1039 = vpop.xlane.xlu0 %1038
        %v1040 = vsel %vm880, %v805, 0.0
        %1041 = vadd.xlane.f32.xlu0 %v1040
        %v1042 = vpop.xlane.xlu0 %1041
        %v1043 = vsel %vm880, %v806, 0.0
        %1044 = vadd.xlane.f32.xlu0 %v1043
        %v1045 = vpop.xlane.xlu0 %1044
        %v1046 = vsel %vm880, %v807, 0.0
        %1047 = vadd.xlane.f32.xlu0 %v1046
        %v1048 = vpop.xlane.xlu0 %1047
        %v1049 = vsel %vm880, %v808, 0.0
        %1050 = vadd.xlane.f32.xlu0 %v1049
        %v1051 = vpop.xlane.xlu0 %1050
        %v1052 = vsel %vm880, %v809, 0.0
        %1053 = vadd.xlane.f32.xlu0 %v1052
        %v1054 = vpop.xlane.xlu0 %1053
        %v1055 = vsel %vm880, %v810, 0.0
        %1056 = vadd.xlane.f32.xlu0 %v1055
        %v1057 = vpop.xlane.xlu0 %1056
        %v1058 = vsel %vm880, %v811, 0.0
        %1059 = vadd.xlane.f32.xlu0 %v1058
        %v1060 = vpop.xlane.xlu0 %1059
        %v1061 = vsel %vm880, %v812, 0.0
        %1062 = vadd.xlane.f32.xlu0 %v1061
        %v1063 = vpop.xlane.xlu0 %1062
        %v1064 = vsel %vm880, %v813, 0.0
        %1065 = vadd.xlane.f32.xlu0 %v1064
        %v1066 = vpop.xlane.xlu0 %1065
        %v1067 = vsel %vm880, %v814, 0.0
        %1068 = vadd.xlane.f32.xlu0 %v1067
        %v1069 = vpop.xlane.xlu0 %1068
        %v1070 = vsel %vm880, %v815, 0.0
        %1071 = vadd.xlane.f32.xlu0 %v1070
        %v1072 = vpop.xlane.xlu0 %1071
        %v1073 = vsel %vm880, %v816, 0.0
        %1074 = vadd.xlane.f32.xlu0 %v1073
        %v1075 = vpop.xlane.xlu0 %1074
        %v1076 = vsel %vm880, %v817, 0.0
        %1077 = vadd.xlane.f32.xlu0 %v1076
        %v1078 = vpop.xlane.xlu0 %1077
        %v1079 = vsel %vm880, %v818, 0.0
        %1080 = vadd.xlane.f32.xlu0 %v1079
        %v1081 = vpop.xlane.xlu0 %1080
        %v1082 = vsel %vm880, %v819, 0.0
        %1083 = vadd.xlane.f32.xlu0 %v1082
        %v1084 = vpop.xlane.xlu0 %1083
        %v1085 = vsel %vm880, %v820, 0.0
        %1086 = vadd.xlane.f32.xlu0 %v1085
        %v1087 = vpop.xlane.xlu0 %1086
        %v1088 = vsel %vm880, %v821, 0.0
        %1089 = vadd.xlane.f32.xlu0 %v1088
        %v1090 = vpop.xlane.xlu0 %1089
        %v1091 = vsel %vm880, %v822, 0.0
        %1092 = vadd.xlane.f32.xlu0 %v1091
        %v1093 = vpop.xlane.xlu0 %1092
        %v1094 = vsel %vm880, %v823, 0.0
        %1095 = vadd.xlane.f32.xlu0 %v1094
        %v1096 = vpop.xlane.xlu0 %1095
        %v1097 = vsel %vm880, %v824, 0.0
        %1098 = vadd.xlane.f32.xlu0 %v1097
        %v1099 = vpop.xlane.xlu0 %1098
        %v1100 = vsel %vm880, %v825, 0.0
        %1101 = vadd.xlane.f32.xlu0 %v1100
        %v1102 = vpop.xlane.xlu0 %1101
        %v1103 = vsel %vm880, %v826, 0.0
        %1104 = vadd.xlane.f32.xlu0 %v1103
        %v1105 = vpop.xlane.xlu0 %1104
        %v1106 = vsel %vm880, %v827, 0.0
        %1107 = vadd.xlane.f32.xlu0 %v1106
        %v1108 = vpop.xlane.xlu0 %1107
        %v1109 = vsel %vm880, %v828, 0.0
        %1110 = vadd.xlane.f32.xlu0 %v1109
        %v1111 = vpop.xlane.xlu0 %1110
        %v1112 = vsel %vm880, %v829, 0.0
        %1113 = vadd.xlane.f32.xlu0 %v1112
        %v1114 = vpop.xlane.xlu0 %1113
        %v1115 = vsel %vm880, %v830, 0.0
        %1116 = vadd.xlane.f32.xlu0 %v1115
        %v1117 = vpop.xlane.xlu0 %1116
        %v1118 = vsel %vm880, %v831, 0.0
        %1119 = vadd.xlane.f32.xlu0 %v1118
        %v1120 = vpop.xlane.xlu0 %1119
        %v1121 = vsel %vm880, %v832, 0.0
        %1122 = vadd.xlane.f32.xlu0 %v1121
        %v1123 = vpop.xlane.xlu0 %1122
        %v1124 = vsel %vm880, %v833, 0.0
        %1125 = vadd.xlane.f32.xlu0 %v1124
        %v1126 = vpop.xlane.xlu0 %1125
        %v1127 = vsel %vm880, %v834, 0.0
        %1128 = vadd.xlane.f32.xlu0 %v1127
        %v1129 = vpop.xlane.xlu0 %1128
        %v1130 = vsel %vm880, %v835, 0.0
        %1131 = vadd.xlane.f32.xlu0 %v1130
        %v1132 = vpop.xlane.xlu0 %1131
        %v1133 = vsel %vm880, %v836, 0.0
        %1134 = vadd.xlane.f32.xlu0 %v1133
        %v1135 = vpop.xlane.xlu0 %1134
        %v1136 = vsel %vm880, %v837, 0.0
        %1137 = vadd.xlane.f32.xlu0 %v1136
        %v1138 = vpop.xlane.xlu0 %1137
        %v1139 = vsel %vm880, %v838, 0.0
        %1140 = vadd.xlane.f32.xlu0 %v1139
        %v1141 = vpop.xlane.xlu0 %1140
        %v1142 = vsel %vm880, %v839, 0.0
        %1143 = vadd.xlane.f32.xlu0 %v1142
        %v1144 = vpop.xlane.xlu0 %1143
        %v1145 = vsel %vm880, %v840, 0.0
        %1146 = vadd.xlane.f32.xlu0 %v1145
        %v1147 = vpop.xlane.xlu0 %1146
        %v1148 = vsel %vm880, %v841, 0.0
        %1149 = vadd.xlane.f32.xlu0 %v1148
        %v1150 = vpop.xlane.xlu0 %1149
        %v1151 = vsel %vm880, %v842, 0.0
        %1152 = vadd.xlane.f32.xlu0 %v1151
        %v1153 = vpop.xlane.xlu0 %1152
        %v1154 = vsel %vm880, %v843, 0.0
        %1155 = vadd.xlane.f32.xlu0 %v1154
        %v1156 = vpop.xlane.xlu0 %1155
        %v1157 = vsel %vm880, %v844, 0.0
        %1158 = vadd.xlane.f32.xlu0 %v1157
        %v1159 = vpop.xlane.xlu0 %1158
        %v1160 = vsel %vm880, %v845, 0.0
        %1161 = vadd.xlane.f32.xlu0 %v1160
        %v1162 = vpop.xlane.xlu0 %1161
        %v1163 = vsel %vm880, %v846, 0.0
        %1164 = vadd.xlane.f32.xlu0 %v1163
        %v1165 = vpop.xlane.xlu0 %1164
        %v1166 = vsel %vm880, %v847, 0.0
        %1167 = vadd.xlane.f32.xlu0 %v1166
        %v1168 = vpop.xlane.xlu0 %1167
        %v1169 = vsel %vm880, %v848, 0.0
        %1170 = vadd.xlane.f32.xlu0 %v1169
        %v1171 = vpop.xlane.xlu0 %1170
        %v1172 = vsel %vm880, %v849, 0.0
        %1173 = vadd.xlane.f32.xlu0 %v1172
        %v1174 = vpop.xlane.xlu0 %1173
        %v1175 = vsel %vm880, %v850, 0.0
        %1176 = vadd.xlane.f32.xlu0 %v1175
        %v1177 = vpop.xlane.xlu0 %1176
        %v1178 = vsel %vm880, %v851, 0.0
        %1179 = vadd.xlane.f32.xlu0 %v1178
        %v1180 = vpop.xlane.xlu0 %1179
        %v1181 = vsel %vm880, %v852, 0.0
        %1182 = vadd.xlane.f32.xlu0 %v1181
        %v1183 = vpop.xlane.xlu0 %1182
        %v1184 = vsel %vm880, %v853, 0.0
        %1185 = vadd.xlane.f32.xlu0 %v1184
        %v1186 = vpop.xlane.xlu0 %1185
        %v1187 = vsel %vm880, %v854, 0.0
        %1188 = vadd.xlane.f32.xlu0 %v1187
        %v1189 = vpop.xlane.xlu0 %1188
        %v1190 = vsel %vm880, %v855, 0.0
        %1191 = vadd.xlane.f32.xlu0 %v1190
        %v1192 = vpop.xlane.xlu0 %1191
        %v1193 = vsel %vm880, %v856, 0.0
        %1194 = vadd.xlane.f32.xlu0 %v1193
        %v1195 = vpop.xlane.xlu0 %1194
        %v1196 = vsel %vm880, %v857, 0.0
        %1197 = vadd.xlane.f32.xlu0 %v1196
        %v1198 = vpop.xlane.xlu0 %1197
        %v1199 = vsel %vm880, %v858, 0.0
        %1200 = vadd.xlane.f32.xlu0 %v1199
        %v1201 = vpop.xlane.xlu0 %1200
        %v1202 = vsel %vm880, %v859, 0.0
        %1203 = vadd.xlane.f32.xlu0 %v1202
        %v1204 = vpop.xlane.xlu0 %1203
        %v1205 = vsel %vm880, %v860, 0.0
        %1206 = vadd.xlane.f32.xlu0 %v1205
        %v1207 = vpop.xlane.xlu0 %1206
        %v1208 = vsel %vm880, %v861, 0.0
        %1209 = vadd.xlane.f32.xlu0 %v1208
        %v1210 = vpop.xlane.xlu0 %1209
        %v1211 = vsel %vm880, %v862, 0.0
        %1212 = vadd.xlane.f32.xlu0 %v1211
        %v1213 = vpop.xlane.xlu0 %1212
        %v1214 = vsel %vm880, %v863, 0.0
        %1215 = vadd.xlane.f32.xlu0 %v1214
        %v1216 = vpop.xlane.xlu0 %1215
        %v1217 = vsel %vm880, %v864, 0.0
        %1218 = vadd.xlane.f32.xlu0 %v1217
        %v1219 = vpop.xlane.xlu0 %1218
        %v1220 = vsel %vm880, %v865, 0.0
        %1221 = vadd.xlane.f32.xlu0 %v1220
        %v1222 = vpop.xlane.xlu0 %1221
        %v1223 = vsel %vm880, %v866, 0.0
        %1224 = vadd.xlane.f32.xlu0 %v1223
        %v1225 = vpop.xlane.xlu0 %1224
        %v1226 = vsel %vm880, %v867, 0.0
        %1227 = vadd.xlane.f32.xlu0 %v1226
        %v1228 = vpop.xlane.xlu0 %1227
        %v1229 = vsel %vm880, %v868, 0.0
        %1230 = vadd.xlane.f32.xlu0 %v1229
        %v1231 = vpop.xlane.xlu0 %1230
        %v1232 = vsel %vm880, %v869, 0.0
        %1233 = vadd.xlane.f32.xlu0 %v1232
        %v1234 = vpop.xlane.xlu0 %1233
        %v1235 = vsel %vm880, %v870, 0.0
        %1236 = vadd.xlane.f32.xlu0 %v1235
        %v1237 = vpop.xlane.xlu0 %1236
        %v1238 = vsel %vm880, %v871, 0.0
        %1239 = vadd.xlane.f32.xlu0 %v1238
        %v1240 = vpop.xlane.xlu0 %1239
        %v1241 = vsel %vm880, %v872, 0.0
        %1242 = vadd.xlane.f32.xlu0 %v1241
        %v1243 = vpop.xlane.xlu0 %1242
        %v1244 = vsel %vm880, %v873, 0.0
        %1245 = vadd.xlane.f32.xlu0 %v1244
        %v1246 = vpop.xlane.xlu0 %1245
        %v1247 = vsel %vm880, %v874, 0.0
        %1248 = vadd.xlane.f32.xlu0 %v1247
        %v1249 = vpop.xlane.xlu0 %1248
        %v1250 = vsel %vm880, %v875, 0.0
        %1251 = vadd.xlane.f32.xlu0 %v1250
        %v1252 = vpop.xlane.xlu0 %1251
        %v1253 = vsel %vm880, %v876, 0.0
        %1254 = vadd.xlane.f32.xlu0 %v1253
        %v1255 = vpop.xlane.xlu0 %1254
        %v1256 = vsel %vm880, %v877, 0.0
        %1257 = vadd.xlane.f32.xlu0 %v1256
        %v1258 = vpop.xlane.xlu0 %1257
        %v1259 = vsel %vm880, %v878, 0.0
        %1260 = vadd.xlane.f32.xlu0 %v1259
        %v1261 = vpop.xlane.xlu0 %1260
        %v1262 = vsel %vm880, %v879, 0.0
        %1263 = vadd.xlane.f32.xlu0 %v1262
        %v1264 = vpop.xlane.xlu0 %1263
        %v1265 = vld [vmem:[#allocation2] sm:$0x3]
        %v1266 = vld [vmem:[%s745] sm:$0xff]
        %v1267 = vld [vmem:[%s745 + $0x8] sm:$0xff]
        %v1268 = vld [vmem:[%s745 + $0x10] sm:$0xff]
        %v1269 = vld [vmem:[%s745 + $0x18] sm:$0xff]
        %v1270 = vld [vmem:[%s745 + $0x20] sm:$0xff]
        %v1271 = vld [vmem:[%s745 + $0x28] sm:$0xff]
        %v1272 = vld [vmem:[%s745 + $0x30] sm:$0xff]
        %v1273 = vld [vmem:[%s745 + $0x38] sm:$0xff]
        %v1274 = vld [vmem:[%s745 + $0x40] sm:$0xff]
        %v1275 = vld [vmem:[%s745 + $0x48] sm:$0xff]
        %v1276 = vld [vmem:[%s745 + $0x50] sm:$0xff]
        %v1277 = vld [vmem:[%s745 + $0x58] sm:$0xff]
        %v1278 = vld [vmem:[%s745 + $0x60] sm:$0xff]
        %v1279 = vld [vmem:[%s745 + $0x68] sm:$0xff]
        %v1280 = vld [vmem:[%s745 + $0x70] sm:$0xff]
        %v1281 = vld [vmem:[%s745 + $0x78] sm:$0xff]
        %v1282 = vld [vmem:[%s745 + $0x80] sm:$0xff]
        %v1283 = vld [vmem:[%s745 + $0x88] sm:$0xff]
        %v1284 = vld [vmem:[%s745 + $0x90] sm:$0xff]
        %v1285 = vld [vmem:[%s745 + $0x98] sm:$0xff]
        %v1286 = vld [vmem:[%s745 + $0xa0] sm:$0xff]
        %v1287 = vld [vmem:[%s745 + $0xa8] sm:$0xff]
        %v1288 = vld [vmem:[%s745 + $0xb0] sm:$0xff]
        %v1289 = vld [vmem:[%s745 + $0xb8] sm:$0xff]
        %v1290 = vld [vmem:[%s745 + $0xc0] sm:$0xff]
        %v1291 = vld [vmem:[%s745 + $0xc8] sm:$0xff]
        %v1292 = vld [vmem:[%s745 + $0xd0] sm:$0xff]
        %v1293 = vld [vmem:[%s745 + $0xd8] sm:$0xff]
        %v1294 = vld [vmem:[%s745 + $0xe0] sm:$0xff]
        %v1295 = vld [vmem:[%s745 + $0xe8] sm:$0xff]
        %v1296 = vld [vmem:[%s745 + $0xf0] sm:$0xff]
        %v1297 = vld [vmem:[%s745 + $0xf8] sm:$0xff]
        %v1298 = vld [vmem:[%s745 + $0x100] sm:$0xff]
        %v1299 = vld [vmem:[%s745 + $0x108] sm:$0xff]
        %v1300 = vld [vmem:[%s745 + $0x110] sm:$0xff]
        %v1301 = vld [vmem:[%s745 + $0x118] sm:$0xff]
        %v1302 = vld [vmem:[%s745 + $0x120] sm:$0xff]
        %v1303 = vld [vmem:[%s745 + $0x128] sm:$0xff]
        %v1304 = vld [vmem:[%s745 + $0x130] sm:$0xff]
        %v1305 = vld [vmem:[%s745 + $0x138] sm:$0xff]
        %v1306 = vld [vmem:[%s745 + $0x140] sm:$0xff]
        %v1307 = vld [vmem:[%s745 + $0x148] sm:$0xff]
        %v1308 = vld [vmem:[%s745 + $0x150] sm:$0xff]
        %v1309 = vld [vmem:[%s745 + $0x158] sm:$0xff]
        %v1310 = vld [vmem:[%s745 + $0x160] sm:$0xff]
        %v1311 = vld [vmem:[%s745 + $0x168] sm:$0xff]
        %v1312 = vld [vmem:[%s745 + $0x170] sm:$0xff]
        %v1313 = vld [vmem:[%s745 + $0x178] sm:$0xff]
        %v1314 = vld [vmem:[%s745 + $0x180] sm:$0xff]
        %v1315 = vld [vmem:[%s745 + $0x188] sm:$0xff]
        %v1316 = vld [vmem:[%s745 + $0x190] sm:$0xff]
        %v1317 = vld [vmem:[%s745 + $0x198] sm:$0xff]
        %v1318 = vld [vmem:[%s745 + $0x1a0] sm:$0xff]
        %v1319 = vld [vmem:[%s745 + $0x1a8] sm:$0xff]
        %v1320 = vld [vmem:[%s745 + $0x1b0] sm:$0xff]
        %v1321 = vld [vmem:[%s745 + $0x1b8] sm:$0xff]
        %v1322 = vld [vmem:[%s745 + $0x1c0] sm:$0xff]
        %v1323 = vld [vmem:[%s745 + $0x1c8] sm:$0xff]
        %v1324 = vld [vmem:[%s745 + $0x1d0] sm:$0xff]
        %v1325 = vld [vmem:[%s745 + $0x1d8] sm:$0xff]
        %v1326 = vld [vmem:[%s745 + $0x1e0] sm:$0xff]
        %v1327 = vld [vmem:[%s745 + $0x1e8] sm:$0xff]
        %v1328 = vld [vmem:[%s745 + $0x1f0] sm:$0xff]
        %v1329 = vld [vmem:[%s745 + $0x1f8] sm:$0xff]
        %v1458 = vlaneseq
        %v1459 = vand.u32 %v1458, 127
        %v1460 = vperm.slane %v883, %v1459
        %v1461 = vadd.s32 %v1459, 4294967288
        %v1462 = vperm.slane %v886, %v1461
        %vm1463 = vcmask 130112
        %v1464 = vsel %vm1463, %v1462, %v1460
        %v1465 = vadd.s32 %v1459, 4294967280
        %v1466 = vperm.slane %v889, %v1465
        %vm1467 = vcmask 195712
        %v1468 = vsel %vm1467, %v1466, %v1464
        %v1469 = vadd.s32 %v1459, 4294967272
        %v1470 = vperm.slane %v892, %v1469
        %vm1471 = vcmask 261312
        %v1472 = vsel %vm1471, %v1470, %v1468
        %v1473 = vadd.s32 %v1459, 4294967264
        %v1474 = vperm.slane %v895, %v1473
        %vm1475 = vcmask 326912
        %v1476 = vsel %vm1475, %v1474, %v1472
        %v1477 = vadd.s32 %v1459, 4294967256
        %v1478 = vperm.slane %v898, %v1477
        %vm1479 = vcmask 392512
        %v1480 = vsel %vm1479, %v1478, %v1476
        %v1481 = vadd.s32 %v1459, 4294967248
        %v1482 = vperm.slane %v901, %v1481
        %vm1483 = vcmask 458112
        %v1484 = vsel %vm1483, %v1482, %v1480
        %v1485 = vadd.s32 %v1459, 4294967240
        %v1486 = vperm.slane %v904, %v1485
        %vm1487 = vcmask 523712
        %v1488 = vsel %vm1487, %v1486, %v1484
        %v1489 = vadd.s32 %v1459, 4294967232
        %v1490 = vperm.slane %v907, %v1489
        %vm1491 = vcmask 589312
        %v1492 = vsel %vm1491, %v1490, %v1488
        %v1493 = vadd.s32 %v1459, 4294967224
        %v1494 = vperm.slane %v910, %v1493
        %vm1495 = vcmask 654912
        %v1496 = vsel %vm1495, %v1494, %v1492
        %v1497 = vadd.s32 %v1459, 4294967216
        %v1498 = vperm.slane %v913, %v1497
        %vm1499 = vcmask 720512
        %v1500 = vsel %vm1499, %v1498, %v1496
        %v1501 = vadd.s32 %v1459, 4294967208
        %v1502 = vperm.slane %v916, %v1501
        %vm1503 = vcmask 786112
        %v1504 = vsel %vm1503, %v1502, %v1500
        %v1505 = vadd.s32 %v1459, 4294967200
        %v1506 = vperm.slane %v919, %v1505
        %vm1507 = vcmask 851712
        %v1508 = vsel %vm1507, %v1506, %v1504
        %v1509 = vadd.s32 %v1459, 4294967192
        %v1510 = vperm.slane %v922, %v1509
        %vm1511 = vcmask 917312
        %v1512 = vsel %vm1511, %v1510, %v1508
        %v1513 = vadd.s32 %v1459, 4294967184
        %v1514 = vperm.slane %v925, %v1513
        %vm1515 = vcmask 982912
        %v1516 = vsel %vm1515, %v1514, %v1512
        %v1517 = vadd.s32 %v1459, 4294967176
        %v1518 = vperm.slane %v928, %v1517
        %vm1519 = vcmask 1048512
        %v1520 = vsel %vm1519, %v1518, %v1516
        %v1521 = vperm.slane %v931, %v1459
        %v1522 = vperm.slane %v934, %v1461
        %v1523 = vsel %vm1463, %v1522, %v1521
        %v1524 = vperm.slane %v937, %v1465
        %v1525 = vsel %vm1467, %v1524, %v1523
        %v1526 = vperm.slane %v940, %v1469
        %v1527 = vsel %vm1471, %v1526, %v1525
        %v1528 = vperm.slane %v943, %v1473
        %v1529 = vsel %vm1475, %v1528, %v1527
        %v1530 = vperm.slane %v946, %v1477
        %v1531 = vsel %vm1479, %v1530, %v1529
        %v1532 = vperm.slane %v949, %v1481
        %v1533 = vsel %vm1483, %v1532, %v1531
        %v1534 = vperm.slane %v952, %v1485
        %v1535 = vsel %vm1487, %v1534, %v1533
        %v1536 = vperm.slane %v955, %v1489
        %v1537 = vsel %vm1491, %v1536, %v1535
        %v1538 = vperm.slane %v958, %v1493
        %v1539 = vsel %vm1495, %v1538, %v1537
        %v1540 = vperm.slane %v961, %v1497
        %v1541 = vsel %vm1499, %v1540, %v1539
        %v1542 = vperm.slane %v964, %v1501
        %v1543 = vsel %vm1503, %v1542, %v1541
        %v1544 = vperm.slane %v967, %v1505
        %v1545 = vsel %vm1507, %v1544, %v1543
        %v1546 = vperm.slane %v970, %v1509
        %v1547 = vsel %vm1511, %v1546, %v1545
        %v1548 = vperm.slane %v973, %v1513
        %v1549 = vsel %vm1515, %v1548, %v1547
        %v1550 = vperm.slane %v976, %v1517
        %v1551 = vsel %vm1519, %v1550, %v1549
        %v1552 = vperm.slane %v979, %v1459
        %v1553 = vperm.slane %v982, %v1461
        %v1554 = vsel %vm1463, %v1553, %v1552
        %v1555 = vperm.slane %v985, %v1465
        %v1556 = vsel %vm1467, %v1555, %v1554
        %v1557 = vperm.slane %v988, %v1469
        %v1558 = vsel %vm1471, %v1557, %v1556
        %v1559 = vperm.slane %v991, %v1473
        %v1560 = vsel %vm1475, %v1559, %v1558
        %v1561 = vperm.slane %v994, %v1477
        %v1562 = vsel %vm1479, %v1561, %v1560
        %v1563 = vperm.slane %v997, %v1481
        %v1564 = vsel %vm1483, %v1563, %v1562
        %v1565 = vperm.slane %v1000, %v1485
        %v1566 = vsel %vm1487, %v1565, %v1564
        %v1567 = vperm.slane %v1003, %v1489
        %v1568 = vsel %vm1491, %v1567, %v1566
        %v1569 = vperm.slane %v1006, %v1493
        %v1570 = vsel %vm1495, %v1569, %v1568
        %v1571 = vperm.slane %v1009, %v1497
        %v1572 = vsel %vm1499, %v1571, %v1570
        %v1573 = vperm.slane %v1012, %v1501
        %v1574 = vsel %vm1503, %v1573, %v1572
        %v1575 = vperm.slane %v1015, %v1505
        %v1576 = vsel %vm1507, %v1575, %v1574
        %v1577 = vperm.slane %v1018, %v1509
        %v1578 = vsel %vm1511, %v1577, %v1576
        %v1579 = vperm.slane %v1021, %v1513
        %v1580 = vsel %vm1515, %v1579, %v1578
        %v1581 = vperm.slane %v1024, %v1517
        %v1582 = vsel %vm1519, %v1581, %v1580
        %v1583 = vperm.slane %v1027, %v1459
        %v1584 = vperm.slane %v1030, %v1461
        %v1585 = vsel %vm1463, %v1584, %v1583
        %v1586 = vperm.slane %v1033, %v1465
        %v1587 = vsel %vm1467, %v1586, %v1585
        %v1588 = vperm.slane %v1036, %v1469
        %v1589 = vsel %vm1471, %v1588, %v1587
        %v1590 = vperm.slane %v1039, %v1473
        %v1591 = vsel %vm1475, %v1590, %v1589
        %v1592 = vperm.slane %v1042, %v1477
        %v1593 = vsel %vm1479, %v1592, %v1591
        %v1594 = vperm.slane %v1045, %v1481
        %v1595 = vsel %vm1483, %v1594, %v1593
        %v1596 = vperm.slane %v1048, %v1485
        %v1597 = vsel %vm1487, %v1596, %v1595
        %v1598 = vperm.slane %v1051, %v1489
        %v1599 = vsel %vm1491, %v1598, %v1597
        %v1600 = vperm.slane %v1054, %v1493
        %v1601 = vsel %vm1495, %v1600, %v1599
        %v1602 = vperm.slane %v1057, %v1497
        %v1603 = vsel %vm1499, %v1602, %v1601
        %v1604 = vperm.slane %v1060, %v1501
        %v1605 = vsel %vm1503, %v1604, %v1603
        %v1606 = vperm.slane %v1063, %v1505
        %v1607 = vsel %vm1507, %v1606, %v1605
        %v1608 = vperm.slane %v1066, %v1509
        %v1609 = vsel %vm1511, %v1608, %v1607
        %v1610 = vperm.slane %v1069, %v1513
        %v1611 = vsel %vm1515, %v1610, %v1609
        %v1612 = vperm.slane %v1072, %v1517
        %v1613 = vsel %vm1519, %v1612, %v1611
        %v1614 = vperm.slane %v1075, %v1459
        %v1615 = vperm.slane %v1078, %v1461
        %v1616 = vsel %vm1463, %v1615, %v1614
        %v1617 = vperm.slane %v1081, %v1465
        %v1618 = vsel %vm1467, %v1617, %v1616
        %v1619 = vperm.slane %v1084, %v1469
        %v1620 = vsel %vm1471, %v1619, %v1618
        %v1621 = vperm.slane %v1087, %v1473
        %v1622 = vsel %vm1475, %v1621, %v1620
        %v1623 = vperm.slane %v1090, %v1477
        %v1624 = vsel %vm1479, %v1623, %v1622
        %v1625 = vperm.slane %v1093, %v1481
        %v1626 = vsel %vm1483, %v1625, %v1624
        %v1627 = vperm.slane %v1096, %v1485
        %v1628 = vsel %vm1487, %v1627, %v1626
        %v1629 = vperm.slane %v1099, %v1489
        %v1630 = vsel %vm1491, %v1629, %v1628
        %v1631 = vperm.slane %v1102, %v1493
        %v1632 = vsel %vm1495, %v1631, %v1630
        %v1633 = vperm.slane %v1105, %v1497
        %v1634 = vsel %vm1499, %v1633, %v1632
        %v1635 = vperm.slane %v1108, %v1501
        %v1636 = vsel %vm1503, %v1635, %v1634
        %v1637 = vperm.slane %v1111, %v1505
        %v1638 = vsel %vm1507, %v1637, %v1636
        %v1639 = vperm.slane %v1114, %v1509
        %v1640 = vsel %vm1511, %v1639, %v1638
        %v1641 = vperm.slane %v1117, %v1513
        %v1642 = vsel %vm1515, %v1641, %v1640
        %v1643 = vperm.slane %v1120, %v1517
        %v1644 = vsel %vm1519, %v1643, %v1642
        %v1645 = vperm.slane %v1123, %v1459
        %v1646 = vperm.slane %v1126, %v1461
        %v1647 = vsel %vm1463, %v1646, %v1645
        %v1648 = vperm.slane %v1129, %v1465
        %v1649 = vsel %vm1467, %v1648, %v1647
        %v1650 = vperm.slane %v1132, %v1469
        %v1651 = vsel %vm1471, %v1650, %v1649
        %v1652 = vperm.slane %v1135, %v1473
        %v1653 = vsel %vm1475, %v1652, %v1651
        %v1654 = vperm.slane %v1138, %v1477
        %v1655 = vsel %vm1479, %v1654, %v1653
        %v1656 = vperm.slane %v1141, %v1481
        %v1657 = vsel %vm1483, %v1656, %v1655
        %v1658 = vperm.slane %v1144, %v1485
        %v1659 = vsel %vm1487, %v1658, %v1657
        %v1660 = vperm.slane %v1147, %v1489
        %v1661 = vsel %vm1491, %v1660, %v1659
        %v1662 = vperm.slane %v1150, %v1493
        %v1663 = vsel %vm1495, %v1662, %v1661
        %v1664 = vperm.slane %v1153, %v1497
        %v1665 = vsel %vm1499, %v1664, %v1663
        %v1666 = vperm.slane %v1156, %v1501
        %v1667 = vsel %vm1503, %v1666, %v1665
        %v1668 = vperm.slane %v1159, %v1505
        %v1669 = vsel %vm1507, %v1668, %v1667
        %v1670 = vperm.slane %v1162, %v1509
        %v1671 = vsel %vm1511, %v1670, %v1669
        %v1672 = vperm.slane %v1165, %v1513
        %v1673 = vsel %vm1515, %v1672, %v1671
        %v1674 = vperm.slane %v1168, %v1517
        %v1675 = vsel %vm1519, %v1674, %v1673
        %v1676 = vperm.slane %v1171, %v1459
        %v1677 = vperm.slane %v1174, %v1461
        %v1678 = vsel %vm1463, %v1677, %v1676
        %v1679 = vperm.slane %v1177, %v1465
        %v1680 = vsel %vm1467, %v1679, %v1678
        %v1681 = vperm.slane %v1180, %v1469
        %v1682 = vsel %vm1471, %v1681, %v1680
        %v1683 = vperm.slane %v1183, %v1473
        %v1684 = vsel %vm1475, %v1683, %v1682
        %v1685 = vperm.slane %v1186, %v1477
        %v1686 = vsel %vm1479, %v1685, %v1684
        %v1687 = vperm.slane %v1189, %v1481
        %v1688 = vsel %vm1483, %v1687, %v1686
        %v1689 = vperm.slane %v1192, %v1485
        %v1690 = vsel %vm1487, %v1689, %v1688
        %v1691 = vperm.slane %v1195, %v1489
        %v1692 = vsel %vm1491, %v1691, %v1690
        %v1693 = vperm.slane %v1198, %v1493
        %v1694 = vsel %vm1495, %v1693, %v1692
        %v1695 = vperm.slane %v1201, %v1497
        %v1696 = vsel %vm1499, %v1695, %v1694
        %v1697 = vperm.slane %v1204, %v1501
        %v1698 = vsel %vm1503, %v1697, %v1696
        %v1699 = vperm.slane %v1207, %v1505
        %v1700 = vsel %vm1507, %v1699, %v1698
        %v1701 = vperm.slane %v1210, %v1509
        %v1702 = vsel %vm1511, %v1701, %v1700
        %v1703 = vperm.slane %v1213, %v1513
        %v1704 = vsel %vm1515, %v1703, %v1702
        %v1705 = vperm.slane %v1216, %v1517
        %v1706 = vsel %vm1519, %v1705, %v1704
        %v1707 = vperm.slane %v1219, %v1459
        %v1708 = vperm.slane %v1222, %v1461
        %v1709 = vsel %vm1463, %v1708, %v1707
        %v1710 = vperm.slane %v1225, %v1465
        %v1711 = vsel %vm1467, %v1710, %v1709
        %v1712 = vperm.slane %v1228, %v1469
        %v1713 = vsel %vm1471, %v1712, %v1711
        %v1714 = vperm.slane %v1231, %v1473
        %v1715 = vsel %vm1475, %v1714, %v1713
        %v1716 = vperm.slane %v1234, %v1477
        %v1717 = vsel %vm1479, %v1716, %v1715
        %v1718 = vperm.slane %v1237, %v1481
        %v1719 = vsel %vm1483, %v1718, %v1717
        %v1720 = vperm.slane %v1240, %v1485
        %v1721 = vsel %vm1487, %v1720, %v1719
        %v1722 = vperm.slane %v1243, %v1489
        %v1723 = vsel %vm1491, %v1722, %v1721
        %v1724 = vperm.slane %v1246, %v1493
        %v1725 = vsel %vm1495, %v1724, %v1723
        %v1726 = vperm.slane %v1249, %v1497
        %v1727 = vsel %vm1499, %v1726, %v1725
        %v1728 = vperm.slane %v1252, %v1501
        %v1729 = vsel %vm1503, %v1728, %v1727
        %v1730 = vperm.slane %v1255, %v1505
        %v1731 = vsel %vm1507, %v1730, %v1729
        %v1732 = vperm.slane %v1258, %v1509
        %v1733 = vsel %vm1511, %v1732, %v1731
        %v1734 = vperm.slane %v1261, %v1513
        %v1735 = vsel %vm1515, %v1734, %v1733
        %v1736 = vperm.slane %v1264, %v1517
        %v1737 = vsel %vm1519, %v1736, %v1735
        %vm1738 = vcmask 1041409
        %v1739 = vsel %vm1738, %v1644, %v1520
        %v1740 = vsel %vm1738, %v1675, %v1551
        %v1741 = vsel %vm1738, %v1706, %v1582
        %v1742 = vsel %vm1738, %v1737, %v1613
        %1747 = vmatpush.msra.mxu0 %v1281
        %1748 = vmatpush.msra.mxu0 %v1280
        %1749 = vmatpush.msra.mxu0 %v1279
        %1750 = vmatpush.msra.mxu0 %v1278
        %1751 = vmatpush.msra.mxu0 %v1277
        %1752 = vmatpush.msra.mxu0 %v1276
        %1753 = vmatpush.msra.mxu0 %v1275
        %1754 = vmatpush.msra.mxu0 %v1274
        %1755 = vmatpush.msra.mxu0 %v1273
        %1756 = vmatpush.msra.mxu0 %v1272
        %1757 = vmatpush.msra.mxu0 %v1271
        %1758 = vmatpush.msra.mxu0 %v1270
        %1759 = vmatpush.msra.mxu0 %v1269
        %1760 = vmatpush.msra.mxu0 %v1268
        %1761 = vmatpush.msra.mxu0 %v1267
        %1762 = vmatpush.msra.mxu0 %v1266
        %1763 = vmatmul.f32.gmra.mxu0 %v1739
        %v1764 = vpop.f32.mrf.mxu0
        %v1765 = vadd.f32 0.0, %v1764
        %1766 = vdwg.mxu0
        %1767 = vmatpush.msra.mxu0 %v1297
        %1768 = vmatpush.msra.mxu0 %v1296
        %1769 = vmatpush.msra.mxu0 %v1295
        %1770 = vmatpush.msra.mxu0 %v1294
        %1771 = vmatpush.msra.mxu0 %v1293
        %1772 = vmatpush.msra.mxu0 %v1292
        %1773 = vmatpush.msra.mxu0 %v1291
        %1774 = vmatpush.msra.mxu0 %v1290
        %1775 = vmatpush.msra.mxu0 %v1289
        %1776 = vmatpush.msra.mxu0 %v1288
        %1777 = vmatpush.msra.mxu0 %v1287
        %1778 = vmatpush.msra.mxu0 %v1286
        %1779 = vmatpush.msra.mxu0 %v1285
        %1780 = vmatpush.msra.mxu0 %v1284
        %1781 = vmatpush.msra.mxu0 %v1283
        %1782 = vmatpush.msra.mxu0 %v1282
        %1783 = vmatmul.f32.gmra.mxu0 %v1740
        %v1784 = vpop.f32.mrf.mxu0
        %v1785 = vadd.f32 %v1765, %v1784
        %1786 = vdwg.mxu0
        %1787 = vmatpush.msra.mxu0 %v1313
        %1788 = vmatpush.msra.mxu0 %v1312
        %1789 = vmatpush.msra.mxu0 %v1311
        %1790 = vmatpush.msra.mxu0 %v1310
        %1791 = vmatpush.msra.mxu0 %v1309
        %1792 = vmatpush.msra.mxu0 %v1308
        %1793 = vmatpush.msra.mxu0 %v1307
        %1794 = vmatpush.msra.mxu0 %v1306
        %1795 = vmatpush.msra.mxu0 %v1305
        %1796 = vmatpush.msra.mxu0 %v1304
        %1797 = vmatpush.msra.mxu0 %v1303
        %1798 = vmatpush.msra.mxu0 %v1302
        %1799 = vmatpush.msra.mxu0 %v1301
        %1800 = vmatpush.msra.mxu0 %v1300
        %1801 = vmatpush.msra.mxu0 %v1299
        %1802 = vmatpush.msra.mxu0 %v1298
        %1803 = vmatmul.f32.gmra.mxu0 %v1741
        %v1804 = vpop.f32.mrf.mxu0
        %v1805 = vadd.f32 %v1785, %v1804
        %1806 = vdwg.mxu0
        %1807 = vmatpush.msra.mxu0 %v1329
        %1808 = vmatpush.msra.mxu0 %v1328
        %1809 = vmatpush.msra.mxu0 %v1327
        %1810 = vmatpush.msra.mxu0 %v1326
        %1811 = vmatpush.msra.mxu0 %v1325
        %1812 = vmatpush.msra.mxu0 %v1324
        %1813 = vmatpush.msra.mxu0 %v1323
        %1814 = vmatpush.msra.mxu0 %v1322
        %1815 = vmatpush.msra.mxu0 %v1321
        %1816 = vmatpush.msra.mxu0 %v1320
        %1817 = vmatpush.msra.mxu0 %v1319
        %1818 = vmatpush.msra.mxu0 %v1318
        %1819 = vmatpush.msra.mxu0 %v1317
        %1820 = vmatpush.msra.mxu0 %v1316
        %1821 = vmatpush.msra.mxu0 %v1315
        %1822 = vmatpush.msra.mxu0 %v1314
        %1823 = vmatmul.f32.gmra.mxu0 %v1742
        %v1824 = vpop.f32.mrf.mxu0
        %v1825 = vadd.f32 %v1805, %v1824
        %1826 = vdwg.mxu0
        %v1827 = vadd.f32 %v1265, %v1825
        %1828 = vst [vmem:[#allocation2] sm:$0x3] %v1827
        %p1829 = scmp.eq.s32.totalorder %s20, 3
        // Predicated region
        $region75: #{tpu_custom_call.1} parent=65 // pred_check
          %p1830 = pneg %p1829
        $region76: #{tpu_custom_call.1} parent=65 // pred_check_branch
          %1832 = sbr.rel (%p1830) target = $region78
        $region77: #{tpu_custom_call.1} parent=65 // pred_region
          %v1833 = vld [vmem:[#allocation2] sm:$0x3]
          %v1834 = vmul.f32 %v1833, 0.015625
          %v1835 = vld [vmem:[%s2] sm:$0x1]
          %v1837 = vperm.slane %v1835, 0
          %v1839 = vadd.f32 %v1834, %v1837
          %1840 = vst [vmem:[#allocation4] sm:$0x3] %v1839
        $region78: #{tpu_custom_call.1} parent=65 // pred_fallthru
          _
        // Predicated region
        $region79: #{tpu_custom_call.1} parent=65 // pred_check
          %p1841 = pneg %p120
        $region80: #{tpu_custom_call.1} parent=65 // pred_check_branch
          %1843 = sbr.rel (%p1841) target = $region82
        $region81: #{tpu_custom_call.1} parent=65 // pred_region
          %1845 = vsyncadd [#allocation5], 0
          %s1846 = smul.addr %s19, 2
          %s1847 = scalar_lea.hbm %s3, %s1846
          %s1849 = sshll.u32 [#allocation4], 4
          %s1850 = int_to_ptr.vmem [resolvable:$true] %s1849
          %s1851 = sshll.u32 %s1847, 4
          %s1852 = int_to_ptr.hbm [resolvable:$true] %s1851
          %1854 = dma.vmem_to_hbm [thread:$0]  %s1850, 32, %s1852, [#allocation5]
        $region82: #{tpu_custom_call.1} parent=65 // pred_fallthru
          _
        // Predicated region
        $region83: #{tpu_custom_call.1} parent=65 // pred_check
          %p1855 = pneg %p120
        $region84: #{tpu_custom_call.1} parent=65 // pred_check_branch
          %1857 = sbr.rel (%p1855) target = $region86
        $region85: #{tpu_custom_call.1} parent=65 // pred_region
          %1859 = dma.done [#allocation5], 32
        $region86: #{tpu_custom_call.1} parent=65 // pred_fallthru
          _
      $region66: #{tpu_custom_call.1} parent=5 // pred_fallthru
        _
      %p1860 = scmp.le.s32.totalorder 2, %s10
      // Predicated region
      $region87: #{tpu_custom_call.1} parent=5 // pred_check
        %p1861 = pneg %p1860
      $region88: #{tpu_custom_call.1} parent=5 // pred_check_branch
        %1863 = sbr.rel (%p1861) target = $region90
      $region89: #{tpu_custom_call.1} parent=5 // pred_region
        %s1864 = ssub.s32 %s10, 2
      $region90: #{tpu_custom_call.1} parent=5 // pred_fallthru
        _
    $region6: #{tpu_custom_call.1} parent=1 // loop_footer
      %s14 = sadd.s32 1, %s10
    $region7: #{tpu_custom_call.1} parent=1 // loop_footer_branch
      %9 = sbr.rel target = $region3
    $region8: #{tpu_custom_call.1} parent=1 // loop_exit
      _
    %1865 = vsyncpa [#allocation5], 1
    %s1866 = scalar_lea.sflag [#allocation5], 1
    %1867 = vsyncpa %s1866, 1

</llo_original>
